<compile_context>
chip_gen: v7x
topology: tpu7x:2x2x1
jax: 0.10.0
libtpu: 0.0.40
codegen_flags: <defaults>
</compile_context>

<pallas_src>
import jax
import jax.numpy as jnp
from jax.experimental import pallas as pl
from jax.experimental.pallas import tpu as pltpu

NSCALES = 2          # cfg.MODEL.SCALE_NUM
HIDDEN_DIM = 32      # cfg.MODEL.HIDDEN_DIM
SNIPPET_LEN = 4      # cfg.MODEL.SNIPPET_LENGTH (patch size of the 1D encoder)
TOPK = 5             # cfg.TEST.TOPK
LANE = 128           # TPU lane width; output slab is padded to this
SUBLANE = 8          # f32 sublane count; query axis is padded to a multiple


# ----------------------------------------------------------------------------
# One fused kernel: video encoder + Q2V stage-1 ranker + bbox regressor.
# All activations live in vregs / VMEM for the whole forward pass.
# ----------------------------------------------------------------------------
def _soonet_kernel(b_r2_ref,                      # SMEM (2,)  f32   regressor head bias
                   x_ref,                         # (L0, P*D)  f32   patchified video
                   q_ref,                         # (Qp, D)    f32   padded query features
                   w_patch_ref, ln_patch_ref,     # (P*D, D) bf16 ; (3, D) f32
                   w_down_ref, ln_down_ref,       # (S-1, 2D, D) bf16 ; (S-1, 3, D) f32
                   w_blk_ref, b_blk_ref,          # (S, D, D) bf16 ; (S, 1, D) f32
                   w_qv_ref,                      # (D, S*D) bf16   fused w_q @ w_v.T
                   w_r1_ref, b_r1_ref, w_r2_ref,  # (D, D) bf16 ; (1, D) f32 ; (2, D) f32
                   *rest):                        # perm matrices ... , out (Qp, 3*LANE)
    perm_refs = rest[:-1]                         # (S-1) x (L_prev, L_prev) bf16
    out_ref = rest[-1]

    f32 = jnp.float32
    bf16 = jnp.bfloat16
    D = HIDDEN_DIM
    Qp = q_ref.shape[0]

    def layer_norm(y, ln):
        # ln rows: [bias, gamma, beta];  y = x @ W (f32 accumulator)
        y = y + ln[0:1, :]
        mu = jnp.mean(y, axis=-1, keepdims=True)
        var = jnp.mean((y - mu) ** 2, axis=-1, keepdims=True)
        return (y - mu) * jax.lax.rsqrt(var + 1e-5) * ln[1:2, :] + ln[2:3, :]

    # ---- patch embedding: Conv1d(kernel=stride=P)  ==  (L0, P*D) @ (P*D, D), then LN
    y = jnp.dot(x_ref[...].astype(bf16), w_patch_ref[...],
                preferred_element_type=f32)
    x = layer_norm(y, ln_patch_ref[...])                        # (L0, D) f32
    x_bf = x.astype(bf16)                                       # reused by block matmul

    # ---- fused query projections (w_q @ w_v.T folded) for ALL scales, hoisted
    q = q_ref[...]
    qw_all = jnp.dot(q.astype(bf16), w_qv_ref[...],
                     preferred_element_type=f32)                # (Qp, NSCALES*D)

    score_blocks = []
    ctx_blocks = []
    for s in range(NSCALES):
        if s > 0:
            # patch merging (downsample by 2):
            #   xr = P @ x       -> rows [x[0],x[2],... ; x[1],x[3],...]
            #   xm = [evens | odds]  (one lane concat)
            #   y  = xm @ w_down     (original (2D, D) reduction)
            # Constant op count (2 matmuls + 1 concat) instead of O(L) slices.
            L = x.shape[0]
            xr = jnp.dot(perm_refs[s - 1][...], x_bf,
                         preferred_element_type=f32)            # exact (0/1 weights)
            xm = jnp.concatenate([xr[:L // 2, :], xr[L // 2:, :]],
                                 axis=1).astype(bf16)           # (L//2, 2D)
            y = jnp.dot(xm, w_down_ref[s - 1], preferred_element_type=f32)
            x = layer_norm(y, ln_down_ref[s - 1])
            x_bf = x.astype(bf16)

        # encoder block
        # TODO(synk): full SwinTransformerV2_1D windowed-attention block not
        # provided; residual MLP stand-in keeps the interface/shapes.
        h = jnp.dot(x_bf, w_blk_ref[s], preferred_element_type=f32) + b_blk_ref[s]
        x = x + jax.nn.gelu(h)
        x_bf = x.astype(bf16)          # reused by ranker AND next-scale downsample
        ctx_blocks.append(x)

        # Q2V stage-1 ranker:  (q @ Wq_s) . (ctx @ Wv_s)^T  ==  (q @ Wqv_s) . ctx^T
        qw_s = qw_all[:, s * D:(s + 1) * D].astype(bf16)
        sc = jax.lax.dot_general(qw_s, x_bf, (((1,), (1,)), ((), ())),
                                 preferred_element_type=f32)    # (Qp, L_s)
        score_blocks.append(sc)

    # ---- concat scales once; everything below is lane-dense
    ctx_all = jnp.concatenate(ctx_blocks, axis=0)               # (A, D) f32
    sc_all = jnp.concatenate(score_blocks, axis=1)              # (Qp, A) f32
    A = sc_all.shape[1]

    # ---- BboxRegressor: one flat (Qp*A, D) MXU pass (single weight push)
    fused_flat = jnp.concatenate([q[i:i + 1, :] * ctx_all for i in range(Qp)],
                                 axis=0)                        # (Qp*A, D) f32
    hmid_flat = jnp.dot(fused_flat.astype(bf16), w_r1_ref[...],
                        preferred_element_type=f32)             # (Qp*A, D)
    hmid_flat = jnp.maximum(hmid_flat + b_r1_ref[...], 0.0)
    # re-split per query (static slices; keeps last dim) and do the 2-wide head
    # as a VPU multiply + lane reduction (no N=2 matmul, no transposes).
    hmid = jnp.stack([hmid_flat[i * A:(i + 1) * A, :] for i in range(Qp)],
                     axis=0)                                    # (Qp, A, D)
    w2 = w_r2_ref[...]                                          # (2, D) f32
    sbias = jnp.sum(hmid * w2[0:1, :][None, :, :], axis=-1) + b_r2_ref[0]   # (Qp, A)
    ebias = jnp.sum(hmid * w2[1:2, :][None, :, :], axis=-1) + b_r2_ref[1]   # (Qp, A)

    # ---- single lane-dense store: [sigmoid(scores) | sbias | ebias], each 128 wide
    zpad = jnp.zeros((Qp, LANE - A), f32)
    out_ref[...] = jnp.concatenate(
        [jax.nn.sigmoid(sc_all), zpad, sbias, zpad, ebias, zpad], axis=1)


# ----------------------------------------------------------------------------
# Deterministic parameter initialization (shapes implied by SOONet.__init__)
# ----------------------------------------------------------------------------
def init_params(key):
    D, P = HIDDEN_DIM, SNIPPET_LEN
    ks = iter(jax.random.split(key, 32))

    def w(shape, dtype=jnp.bfloat16):
        return (0.02 * jax.random.normal(next(ks), shape, jnp.float32)).astype(dtype)

    ln_init = jnp.stack([jnp.zeros(D), jnp.ones(D), jnp.zeros(D)]).astype(jnp.float32)

    p = {}
    # patch embedding (Conv1d kernel=stride=P  ==  (P*D, D) matmul) + LayerNorm
    p["w_patch"] = w((P * D, D))
    p["ln_patch"] = ln_init
    # per-scale patch merging (2D -> D) + LayerNorm
    p["w_down"] = jnp.stack([w((2 * D, D)) for _ in range(NSCALES - 1)])
    p["ln_down"] = jnp.stack([ln_init for _ in range(NSCALES - 1)])
    # per-scale encoder block (stand-in)
    p["w_blk"] = jnp.stack([w((D, D)) for _ in range(NSCALES)])
    p["b_blk"] = jnp.zeros((NSCALES, 1, D), jnp.float32)
    # Q2V stage-1 ranker: both projections are linear with nothing in between,
    # so fold them at init:  W_qv[s] = w_q[s] @ w_v[s].T   (math-identical).
    w_q = [0.02 * jax.random.normal(next(ks), (D, D), jnp.float32)
           for _ in range(NSCALES)]
    w_v = [0.02 * jax.random.normal(next(ks), (D, D), jnp.float32)
           for _ in range(NSCALES)]
    p["w_qv_all"] = jnp.concatenate([wq @ wv.T for wq, wv in zip(w_q, w_v)],
                                    axis=1).astype(jnp.bfloat16)   # (D, NSCALES*D)
    # BboxRegressor MLP (shared over scales): D -> D -> 2
    p["w_r1"] = w((D, D))
    p["b_r1"] = jnp.zeros((1, D), jnp.float32)
    p["w_r2"] = 0.02 * jax.random.normal(next(ks), (2, D), jnp.float32)  # f32 (VPU head)
    p["b_r2"] = jnp.zeros((2,), jnp.float32)
    return p


def _patch_merge_perm(L):
    """(L, L) 0/1 matrix: top half picks even rows, bottom half picks odd rows."""
    half = L // 2
    rows = jnp.arange(half)
    p = jnp.zeros((L, L), jnp.float32)
    p = p.at[rows, 2 * rows].set(1.0)
    p = p.at[half + rows, 2 * rows + 1].set(1.0)
    return p.astype(jnp.bfloat16)


# ----------------------------------------------------------------------------
# SOONet.forward_test (enable_stage2=False, enable_nms=False)
# ----------------------------------------------------------------------------
def soonet_forward_test(params, query_feats, video_feats, start_ts, end_ts):
    B, T, D = video_feats.shape
    assert B == 1, "stage-1 inference path assumes a single video (B == 1)"
    assert T % SNIPPET_LEN == 0
    Q = query_feats.shape[0]
    L0 = T // SNIPPET_LEN
    assert L0 % (2 ** (NSCALES - 1)) == 0
    A = sum(L0 // (2 ** s) for s in range(NSCALES))
    assert A <= LANE, "anchor count must fit in one 128-lane slab"

    # pad the query axis to full f32 sublanes and run the whole batch at once
    Qp = max(SUBLANE, ((Q + SUBLANE - 1) // SUBLANE) * SUBLANE)
    q_pad = jnp.pad(query_feats, ((0, Qp - Q), (0, 0)))

    x_patch = video_feats.reshape(L0, SNIPPET_LEN * D)   # patchify (B == 1)

    # static per-scale even/odd row-selection (permutation) matrices
    perms = [_patch_merge_perm(L0 // (2 ** (s - 1))) for s in range(1, NSCALES)]

    vmem = lambda: pl.BlockSpec(memory_space=pltpu.MemorySpace.VMEM)
    smem = pl.BlockSpec(memory_space=pltpu.MemorySpace.SMEM)

    out = pl.pallas_call(
        _soonet_kernel,
        out_shape=jax.ShapeDtypeStruct((Qp, 3 * LANE), jnp.float32),
        in_specs=[smem] + [vmem() for _ in range(12 + len(perms))],
        out_specs=vmem(),
    )(params["b_r2"], x_patch, q_pad,
      params["w_patch"], params["ln_patch"],
      params["w_down"], params["ln_down"],
      params["w_blk"], params["b_blk"],
      params["w_qv_all"],
      params["w_r1"], params["b_r1"], params["w_r2"],
      *perms)

    scores = out[:Q, :A]                        # sigmoid(qv_ctx_scores), [Q, A]
    sbias = out[:Q, LANE:LANE + A]              # [Q, A]
    ebias = out[:Q, 2 * LANE:2 * LANE + A]      # [Q, A]

    # top-k instead of full argsort + full gather: only TOPK anchors are rescaled
    pred_scores, top_idx = jax.lax.top_k(scores, TOPK)          # [Q, K]
    ori_start = jnp.take_along_axis(start_ts, top_idx, axis=1)
    ori_end = jnp.take_along_axis(end_ts, top_idx, axis=1)
    duration = ori_end - ori_start
    sb = jnp.take_along_axis(sbias, top_idx, axis=1)
    eb = jnp.take_along_axis(ebias, top_idx, axis=1)
    pred_start = jnp.maximum(0.0, ori_start + sb * duration)
    pred_end = ori_end + eb * duration          # reference does not clamp pred_end
    pred_bboxes = jnp.stack([pred_start, pred_end], axis=2)     # [Q, K, 2]
    # TODO(synk): enable_nms=True branch (sequential greedy NMS) not implemented.
    return pred_scores, pred_bboxes


# ----------------------------------------------------------------------------
if __name__ == "__main__":
    key = jax.random.PRNGKey(0)
    kp, kq, kv = jax.random.split(key, 3)

    params = init_params(kp)

    Q = 8                                 # number of text queries (full sublane)
    T = 32                                # number of video frames
    D = HIDDEN_DIM
    query_feats = jax.random.normal(kq, (Q, D), jnp.float32)
    video_feats = jax.random.normal(kv, (1, T, D), jnp.float32)   # layout: [B, T, D]

    # deterministic anchor start / end timestamps per scale, broadcast to queries
    L0 = T // SNIPPET_LEN
    A = sum(L0 // (2 ** s) for s in range(NSCALES))
    starts, ends = [], []
    for s in range(NSCALES):
        L = L0 // (2 ** s)
        span = float(SNIPPET_LEN * (2 ** s))
        st = jnp.arange(L, dtype=jnp.float32) * span
        starts.append(st)
        ends.append(st + span)
    start_ts = jnp.broadcast_to(jnp.concatenate(starts)[None, :], (Q, A))
    end_ts = jnp.broadcast_to(jnp.concatenate(ends)[None, :], (Q, A))

    fwd = jax.jit(soonet_forward_test)
    scores, bboxes = fwd(params, query_feats, video_feats, start_ts, end_ts)
    jax.block_until_ready((scores, bboxes))
    assert scores.shape == (Q, TOPK) and bboxes.shape == (Q, TOPK, 2)
    assert bool(jnp.all(jnp.isfinite(scores))) and bool(jnp.all(jnp.isfinite(bboxes)))
    print("KERNEL_OK")
</pallas_src>

<mosaic_0001>
module attributes {stable_mosaic.version = 11 : i64} {
  func.func @_soonet_kernel(%arg0: memref<2xf32, #tpu.memory_space<smem>>, %arg1: memref<8x128xf32, #tpu.memory_space<vmem>>, %arg2: memref<8x32xf32, #tpu.memory_space<vmem>>, %arg3: memref<128x32xbf16, #tpu.memory_space<vmem>>, %arg4: memref<3x32xf32, #tpu.memory_space<vmem>>, %arg5: memref<1x64x32xbf16, #tpu.memory_space<vmem>>, %arg6: memref<1x3x32xf32, #tpu.memory_space<vmem>>, %arg7: memref<2x32x32xbf16, #tpu.memory_space<vmem>>, %arg8: memref<2x1x32xf32, #tpu.memory_space<vmem>>, %arg9: memref<32x64xbf16, #tpu.memory_space<vmem>>, %arg10: memref<32x32xbf16, #tpu.memory_space<vmem>>, %arg11: memref<1x32xf32, #tpu.memory_space<vmem>>, %arg12: memref<2x32xf32, #tpu.memory_space<vmem>>, %arg13: memref<8x8xbf16, #tpu.memory_space<vmem>>, %arg14: memref<8x384xf32, #tpu.memory_space<vmem>>) attributes {dimension_semantics = [], scalar_prefetch = 0 : i64, scratch_operands = 0 : i64, tpu.core_type = #tpu.core_type<tc>} {
    %c0 = arith.constant 0 : index
    %c0_0 = arith.constant 0 : index
    %0 = vector.load %arg1[%c0, %c0_0] : memref<8x128xf32, #tpu.memory_space<vmem>>, vector<8x128xf32>
    %1 = arith.truncf %0 : vector<8x128xf32> to vector<8x128xbf16>
    %c0_1 = arith.constant 0 : index
    %c0_2 = arith.constant 0 : index
    %2 = vector.load %arg3[%c0_1, %c0_2] : memref<128x32xbf16, #tpu.memory_space<vmem>>, vector<128x32xbf16>
    %cst = arith.constant dense<0.000000e+00> : vector<8x32xf32>
    %3 = tpu.matmul %1, %2, %cst {dimension_numbers = #tpu.dot_dimension_numbers<[1], [0], [0], [1], [0, 0, 1, 1], [], []>} : vector<8x128xbf16>, vector<128x32xbf16>, vector<8x32xf32> -> vector<8x32xf32>
    %c0_3 = arith.constant 0 : index
    %c0_4 = arith.constant 0 : index
    %4 = vector.load %arg4[%c0_3, %c0_4] : memref<3x32xf32, #tpu.memory_space<vmem>>, vector<3x32xf32>
    %5 = vector.extract_strided_slice %4 {offsets = [0, 0], sizes = [1, 32], strides = [1, 1]} : vector<3x32xf32> to vector<1x32xf32>
    %6 = vector.broadcast %5 : vector<1x32xf32> to vector<8x32xf32>
    %7 = arith.addf %3, %6 : vector<8x32xf32>
    %cst_5 = arith.constant dense<0.000000e+00> : vector<8xf32>
    %8 = vector.multi_reduction <add>, %7, %cst_5 [1] : vector<8x32xf32> to vector<8xf32>
    %9 = vector.shape_cast %8 : vector<8xf32> to vector<8x1xf32>
    %cst_6 = arith.constant 3.200000e+01 : f32
    %10 = vector.broadcast %cst_6 : f32 to vector<8x1xf32>
    %11 = arith.divf %9, %10 : vector<8x1xf32>
    %12 = vector.broadcast %11 : vector<8x1xf32> to vector<8x32xf32>
    %13 = arith.subf %7, %12 : vector<8x32xf32>
    %14 = arith.mulf %13, %13 : vector<8x32xf32>
    %cst_7 = arith.constant dense<0.000000e+00> : vector<8xf32>
    %15 = vector.multi_reduction <add>, %14, %cst_7 [1] : vector<8x32xf32> to vector<8xf32>
    %16 = vector.shape_cast %15 : vector<8xf32> to vector<8x1xf32>
    %cst_8 = arith.constant 3.200000e+01 : f32
    %17 = vector.broadcast %cst_8 : f32 to vector<8x1xf32>
    %18 = arith.divf %16, %17 : vector<8x1xf32>
    %19 = vector.broadcast %11 : vector<8x1xf32> to vector<8x32xf32>
    %20 = arith.subf %7, %19 : vector<8x32xf32>
    %cst_9 = arith.constant 9.99999974E-6 : f32
    %21 = vector.broadcast %cst_9 : f32 to vector<8x1xf32>
    %22 = arith.addf %18, %21 : vector<8x1xf32>
    %23 = math.rsqrt %22 : vector<8x1xf32>
    %24 = vector.broadcast %23 : vector<8x1xf32> to vector<8x32xf32>
    %25 = arith.mulf %20, %24 : vector<8x32xf32>
    %26 = vector.extract_strided_slice %4 {offsets = [1, 0], sizes = [1, 32], strides = [1, 1]} : vector<3x32xf32> to vector<1x32xf32>
    %27 = vector.broadcast %26 : vector<1x32xf32> to vector<8x32xf32>
    %28 = arith.mulf %25, %27 : vector<8x32xf32>
    %29 = vector.extract_strided_slice %4 {offsets = [2, 0], sizes = [1, 32], strides = [1, 1]} : vector<3x32xf32> to vector<1x32xf32>
    %30 = vector.broadcast %29 : vector<1x32xf32> to vector<8x32xf32>
    %31 = arith.addf %28, %30 : vector<8x32xf32>
    %32 = arith.truncf %31 : vector<8x32xf32> to vector<8x32xbf16>
    %c0_10 = arith.constant 0 : index
    %c0_11 = arith.constant 0 : index
    %33 = vector.load %arg2[%c0_10, %c0_11] : memref<8x32xf32, #tpu.memory_space<vmem>>, vector<8x32xf32>
    %34 = arith.truncf %33 : vector<8x32xf32> to vector<8x32xbf16>
    %c0_12 = arith.constant 0 : index
    %c0_13 = arith.constant 0 : index
    %35 = vector.load %arg9[%c0_12, %c0_13] : memref<32x64xbf16, #tpu.memory_space<vmem>>, vector<32x64xbf16>
    %cst_14 = arith.constant dense<0.000000e+00> : vector<8x64xf32>
    %36 = tpu.matmul %34, %35, %cst_14 {dimension_numbers = #tpu.dot_dimension_numbers<[1], [0], [0], [1], [0, 0, 1, 1], [], []>} : vector<8x32xbf16>, vector<32x64xbf16>, vector<8x64xf32> -> vector<8x64xf32>
    %c0_15 = arith.constant 0 : index
    %c0_16 = arith.constant 0 : index
    %c0_17 = arith.constant 0 : index
    %37 = vector.load %arg7[%c0_15, %c0_16, %c0_17] : memref<2x32x32xbf16, #tpu.memory_space<vmem>>, vector<1x32x32xbf16>
    %38 = vector.shape_cast %37 : vector<1x32x32xbf16> to vector<32x32xbf16>
    %cst_18 = arith.constant dense<0.000000e+00> : vector<8x32xf32>
    %39 = tpu.matmul %32, %38, %cst_18 {dimension_numbers = #tpu.dot_dimension_numbers<[1], [0], [0], [1], [0, 0, 1, 1], [], []>} : vector<8x32xbf16>, vector<32x32xbf16>, vector<8x32xf32> -> vector<8x32xf32>
    %c0_19 = arith.constant 0 : index
    %c0_20 = arith.constant 0 : index
    %c0_21 = arith.constant 0 : index
    %40 = vector.load %arg8[%c0_19, %c0_20, %c0_21] : memref<2x1x32xf32, #tpu.memory_space<vmem>>, vector<1x1x32xf32>
    %41 = vector.shape_cast %40 : vector<1x1x32xf32> to vector<1x32xf32>
    %42 = vector.broadcast %41 : vector<1x32xf32> to vector<8x32xf32>
    %43 = arith.addf %39, %42 : vector<8x32xf32>
    %44 = arith.mulf %43, %43 : vector<8x32xf32>
    %45 = arith.mulf %43, %44 : vector<8x32xf32>
    %cst_22 = arith.constant 4.471500e-02 : f32
    %46 = vector.broadcast %cst_22 : f32 to vector<8x32xf32>
    %47 = arith.mulf %46, %45 : vector<8x32xf32>
    %48 = arith.addf %43, %47 : vector<8x32xf32>
    %cst_23 = arith.constant 0.797884583 : f32
    %49 = vector.broadcast %cst_23 : f32 to vector<8x32xf32>
    %50 = arith.mulf %49, %48 : vector<8x32xf32>
    %51 = math.tanh %50 : vector<8x32xf32>
    %cst_24 = arith.constant 1.000000e+00 : f32
    %52 = vector.broadcast %cst_24 : f32 to vector<8x32xf32>
    %53 = arith.addf %52, %51 : vector<8x32xf32>
    %cst_25 = arith.constant 5.000000e-01 : f32
    %54 = vector.broadcast %cst_25 : f32 to vector<8x32xf32>
    %55 = arith.mulf %54, %53 : vector<8x32xf32>
    %56 = arith.mulf %43, %55 : vector<8x32xf32>
    %57 = arith.addf %31, %56 : vector<8x32xf32>
    %58 = arith.truncf %57 : vector<8x32xf32> to vector<8x32xbf16>
    %59 = vector.extract_strided_slice %36 {offsets = [0, 0], sizes = [8, 32], strides = [1, 1]} : vector<8x64xf32> to vector<8x32xf32>
    %60 = arith.truncf %59 : vector<8x32xf32> to vector<8x32xbf16>
    %cst_26 = arith.constant dense<0.000000e+00> : vector<8x8xf32>
    %61 = tpu.matmul %60, %58, %cst_26 {dimension_numbers = #tpu.dot_dimension_numbers<[1], [1], [0], [0], [0, 0, 1, 0], [], []>} : vector<8x32xbf16>, vector<8x32xbf16>, vector<8x8xf32> -> vector<8x8xf32>
    %c0_27 = arith.constant 0 : index
    %c0_28 = arith.constant 0 : index
    %62 = vector.load %arg13[%c0_27, %c0_28] : memref<8x8xbf16, #tpu.memory_space<vmem>>, vector<8x8xbf16>
    %cst_29 = arith.constant dense<0.000000e+00> : vector<8x32xf32>
    %63 = tpu.matmul %62, %58, %cst_29 {dimension_numbers = #tpu.dot_dimension_numbers<[1], [0], [0], [1], [0, 0, 1, 1], [], []>} : vector<8x8xbf16>, vector<8x32xbf16>, vector<8x32xf32> -> vector<8x32xf32>
    %64 = vector.extract_strided_slice %63 {offsets = [0, 0], sizes = [4, 32], strides = [1, 1]} : vector<8x32xf32> to vector<4x32xf32>
    %65 = vector.extract_strided_slice %63 {offsets = [4, 0], sizes = [4, 32], strides = [1, 1]} : vector<8x32xf32> to vector<4x32xf32>
    %66 = tpu.concatenate %64, %65 in 1 : vector<4x32xf32>, vector<4x32xf32> -> vector<4x64xf32>
    %67 = arith.truncf %66 : vector<4x64xf32> to vector<4x64xbf16>
    %c0_30 = arith.constant 0 : index
    %c0_31 = arith.constant 0 : index
    %c0_32 = arith.constant 0 : index
    %68 = vector.load %arg5[%c0_30, %c0_31, %c0_32] : memref<1x64x32xbf16, #tpu.memory_space<vmem>>, vector<1x64x32xbf16>
    %69 = vector.shape_cast %68 : vector<1x64x32xbf16> to vector<64x32xbf16>
    %cst_33 = arith.constant dense<0.000000e+00> : vector<4x32xf32>
    %70 = tpu.matmul %67, %69, %cst_33 {dimension_numbers = #tpu.dot_dimension_numbers<[1], [0], [0], [1], [0, 0, 1, 1], [], []>} : vector<4x64xbf16>, vector<64x32xbf16>, vector<4x32xf32> -> vector<4x32xf32>
    %c0_34 = arith.constant 0 : index
    %c0_35 = arith.constant 0 : index
    %c0_36 = arith.constant 0 : index
    %71 = vector.load %arg6[%c0_34, %c0_35, %c0_36] : memref<1x3x32xf32, #tpu.memory_space<vmem>>, vector<1x3x32xf32>
    %72 = vector.shape_cast %71 : vector<1x3x32xf32> to vector<3x32xf32>
    %73 = vector.extract_strided_slice %72 {offsets = [0, 0], sizes = [1, 32], strides = [1, 1]} : vector<3x32xf32> to vector<1x32xf32>
    %74 = vector.broadcast %73 : vector<1x32xf32> to vector<4x32xf32>
    %75 = arith.addf %70, %74 : vector<4x32xf32>
    %cst_37 = arith.constant dense<0.000000e+00> : vector<4xf32>
    %76 = vector.multi_reduction <add>, %75, %cst_37 [1] : vector<4x32xf32> to vector<4xf32>
    %77 = vector.shape_cast %76 : vector<4xf32> to vector<4x1xf32>
    %cst_38 = arith.constant 3.200000e+01 : f32
    %78 = vector.broadcast %cst_38 : f32 to vector<4x1xf32>
    %79 = arith.divf %77, %78 : vector<4x1xf32>
    %80 = vector.broadcast %79 : vector<4x1xf32> to vector<4x32xf32>
    %81 = arith.subf %75, %80 : vector<4x32xf32>
    %82 = arith.mulf %81, %81 : vector<4x32xf32>
    %cst_39 = arith.constant dense<0.000000e+00> : vector<4xf32>
    %83 = vector.multi_reduction <add>, %82, %cst_39 [1] : vector<4x32xf32> to vector<4xf32>
    %84 = vector.shape_cast %83 : vector<4xf32> to vector<4x1xf32>
    %cst_40 = arith.constant 3.200000e+01 : f32
    %85 = vector.broadcast %cst_40 : f32 to vector<4x1xf32>
    %86 = arith.divf %84, %85 : vector<4x1xf32>
    %87 = vector.broadcast %79 : vector<4x1xf32> to vector<4x32xf32>
    %88 = arith.subf %75, %87 : vector<4x32xf32>
    %cst_41 = arith.constant 9.99999974E-6 : f32
    %89 = vector.broadcast %cst_41 : f32 to vector<4x1xf32>
    %90 = arith.addf %86, %89 : vector<4x1xf32>
    %91 = math.rsqrt %90 : vector<4x1xf32>
    %92 = vector.broadcast %91 : vector<4x1xf32> to vector<4x32xf32>
    %93 = arith.mulf %88, %92 : vector<4x32xf32>
    %94 = vector.extract_strided_slice %72 {offsets = [1, 0], sizes = [1, 32], strides = [1, 1]} : vector<3x32xf32> to vector<1x32xf32>
    %95 = vector.broadcast %94 : vector<1x32xf32> to vector<4x32xf32>
    %96 = arith.mulf %93, %95 : vector<4x32xf32>
    %97 = vector.extract_strided_slice %72 {offsets = [2, 0], sizes = [1, 32], strides = [1, 1]} : vector<3x32xf32> to vector<1x32xf32>
    %98 = vector.broadcast %97 : vector<1x32xf32> to vector<4x32xf32>
    %99 = arith.addf %96, %98 : vector<4x32xf32>
    %100 = arith.truncf %99 : vector<4x32xf32> to vector<4x32xbf16>
    %c1 = arith.constant 1 : index
    %c0_42 = arith.constant 0 : index
    %c0_43 = arith.constant 0 : index
    %101 = vector.load %arg7[%c1, %c0_42, %c0_43] : memref<2x32x32xbf16, #tpu.memory_space<vmem>>, vector<1x32x32xbf16>
    %102 = vector.shape_cast %101 : vector<1x32x32xbf16> to vector<32x32xbf16>
    %cst_44 = arith.constant dense<0.000000e+00> : vector<4x32xf32>
    %103 = tpu.matmul %100, %102, %cst_44 {dimension_numbers = #tpu.dot_dimension_numbers<[1], [0], [0], [1], [0, 0, 1, 1], [], []>} : vector<4x32xbf16>, vector<32x32xbf16>, vector<4x32xf32> -> vector<4x32xf32>
    %c1_45 = arith.constant 1 : index
    %c0_46 = arith.constant 0 : index
    %c0_47 = arith.constant 0 : index
    %104 = vector.load %arg8[%c1_45, %c0_46, %c0_47] : memref<2x1x32xf32, #tpu.memory_space<vmem>>, vector<1x1x32xf32>
    %105 = vector.shape_cast %104 : vector<1x1x32xf32> to vector<1x32xf32>
    %106 = vector.broadcast %105 : vector<1x32xf32> to vector<4x32xf32>
    %107 = arith.addf %103, %106 : vector<4x32xf32>
    %108 = arith.mulf %107, %107 : vector<4x32xf32>
    %109 = arith.mulf %107, %108 : vector<4x32xf32>
    %cst_48 = arith.constant 4.471500e-02 : f32
    %110 = vector.broadcast %cst_48 : f32 to vector<4x32xf32>
    %111 = arith.mulf %110, %109 : vector<4x32xf32>
    %112 = arith.addf %107, %111 : vector<4x32xf32>
    %cst_49 = arith.constant 0.797884583 : f32
    %113 = vector.broadcast %cst_49 : f32 to vector<4x32xf32>
    %114 = arith.mulf %113, %112 : vector<4x32xf32>
    %115 = math.tanh %114 : vector<4x32xf32>
    %cst_50 = arith.constant 1.000000e+00 : f32
    %116 = vector.broadcast %cst_50 : f32 to vector<4x32xf32>
    %117 = arith.addf %116, %115 : vector<4x32xf32>
    %cst_51 = arith.constant 5.000000e-01 : f32
    %118 = vector.broadcast %cst_51 : f32 to vector<4x32xf32>
    %119 = arith.mulf %118, %117 : vector<4x32xf32>
    %120 = arith.mulf %107, %119 : vector<4x32xf32>
    %121 = arith.addf %99, %120 : vector<4x32xf32>
    %122 = arith.truncf %121 : vector<4x32xf32> to vector<4x32xbf16>
    %123 = vector.extract_strided_slice %36 {offsets = [0, 32], sizes = [8, 32], strides = [1, 1]} : vector<8x64xf32> to vector<8x32xf32>
    %124 = arith.truncf %123 : vector<8x32xf32> to vector<8x32xbf16>
    %cst_52 = arith.constant dense<0.000000e+00> : vector<8x4xf32>
    %125 = tpu.matmul %124, %122, %cst_52 {dimension_numbers = #tpu.dot_dimension_numbers<[1], [1], [0], [0], [0, 0, 1, 0], [], []>} : vector<8x32xbf16>, vector<4x32xbf16>, vector<8x4xf32> -> vector<8x4xf32>
    %126 = tpu.concatenate %57, %121 in 0 : vector<8x32xf32>, vector<4x32xf32> -> vector<12x32xf32>
    %127 = tpu.concatenate %61, %125 in 1 : vector<8x8xf32>, vector<8x4xf32> -> vector<8x12xf32>
    %128 = vector.extract_strided_slice %33 {offsets = [0, 0], sizes = [1, 32], strides = [1, 1]} : vector<8x32xf32> to vector<1x32xf32>
    %129 = vector.broadcast %128 : vector<1x32xf32> to vector<12x32xf32>
    %130 = arith.mulf %129, %126 : vector<12x32xf32>
    %131 = vector.extract_strided_slice %33 {offsets = [1, 0], sizes = [1, 32], strides = [1, 1]} : vector<8x32xf32> to vector<1x32xf32>
    %132 = vector.broadcast %131 : vector<1x32xf32> to vector<12x32xf32>
    %133 = arith.mulf %132, %126 : vector<12x32xf32>
    %134 = vector.extract_strided_slice %33 {offsets = [2, 0], sizes = [1, 32], strides = [1, 1]} : vector<8x32xf32> to vector<1x32xf32>
    %135 = vector.broadcast %134 : vector<1x32xf32> to vector<12x32xf32>
    %136 = arith.mulf %135, %126 : vector<12x32xf32>
    %137 = vector.extract_strided_slice %33 {offsets = [3, 0], sizes = [1, 32], strides = [1, 1]} : vector<8x32xf32> to vector<1x32xf32>
    %138 = vector.broadcast %137 : vector<1x32xf32> to vector<12x32xf32>
    %139 = arith.mulf %138, %126 : vector<12x32xf32>
    %140 = vector.extract_strided_slice %33 {offsets = [4, 0], sizes = [1, 32], strides = [1, 1]} : vector<8x32xf32> to vector<1x32xf32>
    %141 = vector.broadcast %140 : vector<1x32xf32> to vector<12x32xf32>
    %142 = arith.mulf %141, %126 : vector<12x32xf32>
    %143 = vector.extract_strided_slice %33 {offsets = [5, 0], sizes = [1, 32], strides = [1, 1]} : vector<8x32xf32> to vector<1x32xf32>
    %144 = vector.broadcast %143 : vector<1x32xf32> to vector<12x32xf32>
    %145 = arith.mulf %144, %126 : vector<12x32xf32>
    %146 = vector.extract_strided_slice %33 {offsets = [6, 0], sizes = [1, 32], strides = [1, 1]} : vector<8x32xf32> to vector<1x32xf32>
    %147 = vector.broadcast %146 : vector<1x32xf32> to vector<12x32xf32>
    %148 = arith.mulf %147, %126 : vector<12x32xf32>
    %149 = vector.extract_strided_slice %33 {offsets = [7, 0], sizes = [1, 32], strides = [1, 1]} : vector<8x32xf32> to vector<1x32xf32>
    %150 = vector.broadcast %149 : vector<1x32xf32> to vector<12x32xf32>
    %151 = arith.mulf %150, %126 : vector<12x32xf32>
    %152 = tpu.concatenate %130, %133, %136, %139, %142, %145, %148, %151 in 0 : vector<12x32xf32>, vector<12x32xf32>, vector<12x32xf32>, vector<12x32xf32>, vector<12x32xf32>, vector<12x32xf32>, vector<12x32xf32>, vector<12x32xf32> -> vector<96x32xf32>
    %153 = arith.truncf %152 : vector<96x32xf32> to vector<96x32xbf16>
    %c0_53 = arith.constant 0 : index
    %c0_54 = arith.constant 0 : index
    %154 = vector.load %arg10[%c0_53, %c0_54] : memref<32x32xbf16, #tpu.memory_space<vmem>>, vector<32x32xbf16>
    %cst_55 = arith.constant dense<0.000000e+00> : vector<96x32xf32>
    %155 = tpu.matmul %153, %154, %cst_55 {dimension_numbers = #tpu.dot_dimension_numbers<[1], [0], [0], [1], [0, 0, 1, 1], [], []>} : vector<96x32xbf16>, vector<32x32xbf16>, vector<96x32xf32> -> vector<96x32xf32>
    %c0_56 = arith.constant 0 : index
    %c0_57 = arith.constant 0 : index
    %156 = vector.load %arg11[%c0_56, %c0_57] : memref<1x32xf32, #tpu.memory_space<vmem>>, vector<1x32xf32>
    %157 = vector.broadcast %156 : vector<1x32xf32> to vector<96x32xf32>
    %158 = arith.addf %155, %157 : vector<96x32xf32>
    %cst_58 = arith.constant 0.000000e+00 : f32
    %159 = vector.broadcast %cst_58 : f32 to vector<96x32xf32>
    %160 = arith.maximumf %158, %159 : vector<96x32xf32>
    %161 = vector.extract_strided_slice %160 {offsets = [0, 0], sizes = [12, 32], strides = [1, 1]} : vector<96x32xf32> to vector<12x32xf32>
    %162 = vector.extract_strided_slice %160 {offsets = [12, 0], sizes = [12, 32], strides = [1, 1]} : vector<96x32xf32> to vector<12x32xf32>
    %163 = vector.extract_strided_slice %160 {offsets = [24, 0], sizes = [12, 32], strides = [1, 1]} : vector<96x32xf32> to vector<12x32xf32>
    %164 = vector.extract_strided_slice %160 {offsets = [36, 0], sizes = [12, 32], strides = [1, 1]} : vector<96x32xf32> to vector<12x32xf32>
    %165 = vector.extract_strided_slice %160 {offsets = [48, 0], sizes = [12, 32], strides = [1, 1]} : vector<96x32xf32> to vector<12x32xf32>
    %166 = vector.extract_strided_slice %160 {offsets = [60, 0], sizes = [12, 32], strides = [1, 1]} : vector<96x32xf32> to vector<12x32xf32>
    %167 = vector.extract_strided_slice %160 {offsets = [72, 0], sizes = [12, 32], strides = [1, 1]} : vector<96x32xf32> to vector<12x32xf32>
    %168 = vector.extract_strided_slice %160 {offsets = [84, 0], sizes = [12, 32], strides = [1, 1]} : vector<96x32xf32> to vector<12x32xf32>
    %169 = vector.shape_cast %161 : vector<12x32xf32> to vector<1x12x32xf32>
    %170 = vector.shape_cast %162 : vector<12x32xf32> to vector<1x12x32xf32>
    %171 = vector.shape_cast %163 : vector<12x32xf32> to vector<1x12x32xf32>
    %172 = vector.shape_cast %164 : vector<12x32xf32> to vector<1x12x32xf32>
    %173 = vector.shape_cast %165 : vector<12x32xf32> to vector<1x12x32xf32>
    %174 = vector.shape_cast %166 : vector<12x32xf32> to vector<1x12x32xf32>
    %175 = vector.shape_cast %167 : vector<12x32xf32> to vector<1x12x32xf32>
    %176 = vector.shape_cast %168 : vector<12x32xf32> to vector<1x12x32xf32>
    %177 = tpu.concatenate %169, %170, %171, %172, %173, %174, %175, %176 in 0 : vector<1x12x32xf32>, vector<1x12x32xf32>, vector<1x12x32xf32>, vector<1x12x32xf32>, vector<1x12x32xf32>, vector<1x12x32xf32>, vector<1x12x32xf32>, vector<1x12x32xf32> -> vector<8x12x32xf32>
    %c0_59 = arith.constant 0 : index
    %c0_60 = arith.constant 0 : index
    %178 = vector.load %arg12[%c0_59, %c0_60] : memref<2x32xf32, #tpu.memory_space<vmem>>, vector<2x32xf32>
    %179 = vector.extract_strided_slice %178 {offsets = [0, 0], sizes = [1, 32], strides = [1, 1]} : vector<2x32xf32> to vector<1x32xf32>
    %180 = vector.shape_cast %179 : vector<1x32xf32> to vector<1x1x32xf32>
    %181 = vector.broadcast %180 : vector<1x1x32xf32> to vector<8x12x32xf32>
    %182 = arith.mulf %177, %181 : vector<8x12x32xf32>
    %cst_61 = arith.constant dense<0.000000e+00> : vector<8x12xf32>
    %183 = vector.multi_reduction <add>, %182, %cst_61 [2] : vector<8x12x32xf32> to vector<8x12xf32>
    %c0_62 = arith.constant 0 : index
    %184 = memref.load %arg0[%c0_62] : memref<2xf32, #tpu.memory_space<smem>>
    %185 = vector.broadcast %184 : f32 to vector<8x12xf32>
    %186 = arith.addf %183, %185 : vector<8x12xf32>
    %187 = vector.extract_strided_slice %178 {offsets = [1, 0], sizes = [1, 32], strides = [1, 1]} : vector<2x32xf32> to vector<1x32xf32>
    %188 = vector.shape_cast %187 : vector<1x32xf32> to vector<1x1x32xf32>
    %189 = vector.broadcast %188 : vector<1x1x32xf32> to vector<8x12x32xf32>
    %190 = arith.mulf %177, %189 : vector<8x12x32xf32>
    %cst_63 = arith.constant dense<0.000000e+00> : vector<8x12xf32>
    %191 = vector.multi_reduction <add>, %190, %cst_63 [2] : vector<8x12x32xf32> to vector<8x12xf32>
    %c1_64 = arith.constant 1 : index
    %192 = memref.load %arg0[%c1_64] : memref<2xf32, #tpu.memory_space<smem>>
    %193 = vector.broadcast %192 : f32 to vector<8x12xf32>
    %194 = arith.addf %191, %193 : vector<8x12xf32>
    %cst_65 = arith.constant 0.000000e+00 : f32
    %195 = vector.broadcast %cst_65 : f32 to vector<8x116xf32>
    %196 = arith.negf %127 : vector<8x12xf32>
    %197 = math.exp %196 : vector<8x12xf32>
    %cst_66 = arith.constant 1.000000e+00 : f32
    %198 = vector.broadcast %cst_66 : f32 to vector<8x12xf32>
    %199 = arith.addf %198, %197 : vector<8x12xf32>
    %200 = arith.divf %198, %199 : vector<8x12xf32>
    %201 = tpu.concatenate %200, %195, %186, %195, %194, %195 in 1 : vector<8x12xf32>, vector<8x116xf32>, vector<8x12xf32>, vector<8x116xf32>, vector<8x12xf32>, vector<8x116xf32> -> vector<8x384xf32>
    %c0_67 = arith.constant 0 : index
    %c0_68 = arith.constant 0 : index
    %202 = vector.load %arg14[%c0_67, %c0_68] : memref<8x384xf32, #tpu.memory_space<vmem>>, vector<8x384xf32>
    tpu.vector_store %arg14[%c0_67, %c0_68], %201 {strides = array<i32>} : memref<8x384xf32, #tpu.memory_space<vmem>>, vector<8x384xf32>,
    return
  }
}

</mosaic_0001>

<llo_original>
// kernel: soonet_forward_test.1
$region0: #{soonet_forward_test.1}
  #allocation0 [shape = 'u32[]', space=smem, size = 0x4, offset = 0x4, fixed_abs, tag = 'smem constant byte address 0x4 - core index']
  #allocation1 [shape = 'u32[144,128]{1,0:T(1,128)}', space=vmem, size = 0x12000, scoped, tag = 'internal scratch']
  %s0 = inlined_call_operand.vmem [shape: f32[2], index: 0, kind: input, shape index: {}]
  %s1 = inlined_call_operand.vmem [shape: f32[8,128], index: 1, kind: input, shape index: {}]
  %s2 = inlined_call_operand.vmem [shape: f32[8,32], index: 2, kind: input, shape index: {}]
  %s3 = inlined_call_operand.vmem [shape: bf16[128,32], index: 3, kind: input, shape index: {}]
  %s4 = inlined_call_operand.vmem [shape: f32[3,32], index: 4, kind: input, shape index: {}]
  %s5 = inlined_call_operand.vmem [shape: bf16[1,64,32], index: 5, kind: input, shape index: {}]
  %s6 = inlined_call_operand.vmem [shape: f32[1,3,32], index: 6, kind: input, shape index: {}]
  %s7 = inlined_call_operand.vmem [shape: bf16[2,32,32], index: 7, kind: input, shape index: {}]
  %s8 = inlined_call_operand.vmem [shape: f32[2,1,32], index: 8, kind: input, shape index: {}]
  %s9 = inlined_call_operand.vmem [shape: bf16[32,64], index: 9, kind: input, shape index: {}]
  %s10 = inlined_call_operand.vmem [shape: bf16[32,32], index: 10, kind: input, shape index: {}]
  %s11 = inlined_call_operand.vmem [shape: f32[1,32], index: 11, kind: input, shape index: {}]
  %s12 = inlined_call_operand.vmem [shape: f32[2,32], index: 12, kind: input, shape index: {}]
  %s13 = inlined_call_operand.vmem [shape: bf16[8,8], index: 13, kind: input, shape index: {}]
  %s14 = inlined_call_operand.vmem [shape: f32[8,384], index: 14, kind: output, shape index: {}]
  %s15 = sld [smem:[#allocation0]]
  $region70: #{soonet_forward_test.1} parent=0
    _
  %s17 = ssub.s32 1, %s15
  %s18 = scalar_select 0, %s17, %s15
  $region1: #{soonet_forward_test.1} parent=0
    #allocation2 [shape = 'u8[512]{0}', space=smem, size = 0x200, scoped, tag = 'input window, operand 0, single buffered']
    #allocation3 [shape = 's32[1]{0}', space=sflag, size = 0x4, scoped, tag = 'scoped memory for soonet_forward_test.1']
    %19 = vsyncpa [#allocation3], 0
    // Predicated region
    $region2: #{soonet_forward_test.1} parent=1 // pred_check
      _
    $region3: #{soonet_forward_test.1} parent=1 // pred_check_branch
      %21 = sbr.rel (0) target = $region5
    $region4: #{soonet_forward_test.1} parent=1 // pred_region
      %s23 = ssub.s32 16, 16
      %24 = vsyncadd [#allocation3], %s23
      %s26 = sshll.u32 %s0, 4
      %s27 = int_to_ptr.vmem [resolvable:$true] %s26
      %29 = dma.vmem_to_smem %s27, 16, [#allocation2], [#allocation3]
    $region5: #{soonet_forward_test.1} parent=1 // pred_fallthru
      _
    // Predicated region
    $region6: #{soonet_forward_test.1} parent=1 // pred_check
      _
    $region7: #{soonet_forward_test.1} parent=1 // pred_check_branch
      %31 = sbr.rel (0) target = $region9
    $region8: #{soonet_forward_test.1} parent=1 // pred_region
      _
    $region9: #{soonet_forward_test.1} parent=1 // pred_fallthru
      _
    // Predicated region
    $region10: #{soonet_forward_test.1} parent=1 // pred_check
      _
    $region11: #{soonet_forward_test.1} parent=1 // pred_check_branch
      %33 = sbr.rel (0) target = $region13
    $region12: #{soonet_forward_test.1} parent=1 // pred_region
      _
    $region13: #{soonet_forward_test.1} parent=1 // pred_fallthru
      _
    // Predicated region
    $region14: #{soonet_forward_test.1} parent=1 // pred_check
      _
    $region15: #{soonet_forward_test.1} parent=1 // pred_check_branch
      %35 = sbr.rel (0) target = $region17
    $region16: #{soonet_forward_test.1} parent=1 // pred_region
      _
    $region17: #{soonet_forward_test.1} parent=1 // pred_fallthru
      _
    // Predicated region
    $region18: #{soonet_forward_test.1} parent=1 // pred_check
      _
    $region19: #{soonet_forward_test.1} parent=1 // pred_check_branch
      %37 = sbr.rel (0) target = $region21
    $region20: #{soonet_forward_test.1} parent=1 // pred_region
      _
    $region21: #{soonet_forward_test.1} parent=1 // pred_fallthru
      _
    // Predicated region
    $region22: #{soonet_forward_test.1} parent=1 // pred_check
      _
    $region23: #{soonet_forward_test.1} parent=1 // pred_check_branch
      %39 = sbr.rel (0) target = $region25
    $region24: #{soonet_forward_test.1} parent=1 // pred_region
      _
    $region25: #{soonet_forward_test.1} parent=1 // pred_fallthru
      _
    // Predicated region
    $region26: #{soonet_forward_test.1} parent=1 // pred_check
      _
    $region27: #{soonet_forward_test.1} parent=1 // pred_check_branch
      %41 = sbr.rel (0) target = $region29
    $region28: #{soonet_forward_test.1} parent=1 // pred_region
      _
    $region29: #{soonet_forward_test.1} parent=1 // pred_fallthru
      _
    // Predicated region
    $region30: #{soonet_forward_test.1} parent=1 // pred_check
      _
    $region31: #{soonet_forward_test.1} parent=1 // pred_check_branch
      %43 = sbr.rel (0) target = $region33
    $region32: #{soonet_forward_test.1} parent=1 // pred_region
      _
    $region33: #{soonet_forward_test.1} parent=1 // pred_fallthru
      _
    // Predicated region
    $region34: #{soonet_forward_test.1} parent=1 // pred_check
      _
    $region35: #{soonet_forward_test.1} parent=1 // pred_check_branch
      %45 = sbr.rel (0) target = $region37
    $region36: #{soonet_forward_test.1} parent=1 // pred_region
      _
    $region37: #{soonet_forward_test.1} parent=1 // pred_fallthru
      _
    // Predicated region
    $region38: #{soonet_forward_test.1} parent=1 // pred_check
      _
    $region39: #{soonet_forward_test.1} parent=1 // pred_check_branch
      %47 = sbr.rel (0) target = $region41
    $region40: #{soonet_forward_test.1} parent=1 // pred_region
      _
    $region41: #{soonet_forward_test.1} parent=1 // pred_fallthru
      _
    // Predicated region
    $region42: #{soonet_forward_test.1} parent=1 // pred_check
      _
    $region43: #{soonet_forward_test.1} parent=1 // pred_check_branch
      %49 = sbr.rel (0) target = $region45
    $region44: #{soonet_forward_test.1} parent=1 // pred_region
      _
    $region45: #{soonet_forward_test.1} parent=1 // pred_fallthru
      _
    // Predicated region
    $region46: #{soonet_forward_test.1} parent=1 // pred_check
      _
    $region47: #{soonet_forward_test.1} parent=1 // pred_check_branch
      %51 = sbr.rel (0) target = $region49
    $region48: #{soonet_forward_test.1} parent=1 // pred_region
      _
    $region49: #{soonet_forward_test.1} parent=1 // pred_fallthru
      _
    // Predicated region
    $region50: #{soonet_forward_test.1} parent=1 // pred_check
      _
    $region51: #{soonet_forward_test.1} parent=1 // pred_check_branch
      %53 = sbr.rel (0) target = $region53
    $region52: #{soonet_forward_test.1} parent=1 // pred_region
      _
    $region53: #{soonet_forward_test.1} parent=1 // pred_fallthru
      _
    // Predicated region
    $region54: #{soonet_forward_test.1} parent=1 // pred_check
      _
    $region55: #{soonet_forward_test.1} parent=1 // pred_check_branch
      %55 = sbr.rel (0) target = $region57
    $region56: #{soonet_forward_test.1} parent=1 // pred_region
      _
    $region57: #{soonet_forward_test.1} parent=1 // pred_fallthru
      _
    // Predicated region
    $region58: #{soonet_forward_test.1} parent=1 // pred_check
      _
    $region59: #{soonet_forward_test.1} parent=1 // pred_check_branch
      %57 = sbr.rel (0) target = $region61
    $region60: #{soonet_forward_test.1} parent=1 // pred_region
      %58 = dma.done [#allocation3], 16
    $region61: #{soonet_forward_test.1} parent=1 // pred_fallthru
      _
    %59 = sfence
    %v61 = vld [vmem:[%s1] sm:$0xff]
    %v62 = vpack.c.bf16 %v61, %v61
    %v63 = vld [vmem:[%s3] sm:$0xf]
    %v64 = vld [vmem:[%s3 + $0x4] sm:$0xf]
    %v65 = vld [vmem:[%s3 + $0x8] sm:$0xf]
    %v66 = vld [vmem:[%s3 + $0xc] sm:$0xf]
    %v67 = vld [vmem:[%s3 + $0x10] sm:$0xf]
    %v68 = vld [vmem:[%s3 + $0x14] sm:$0xf]
    %v69 = vld [vmem:[%s3 + $0x18] sm:$0xf]
    %v70 = vld [vmem:[%s3 + $0x1c] sm:$0xf]
    %v71 = vld [vmem:[%s3 + $0x20] sm:$0xf]
    %v72 = vld [vmem:[%s3 + $0x24] sm:$0xf]
    %v73 = vld [vmem:[%s3 + $0x28] sm:$0xf]
    %v74 = vld [vmem:[%s3 + $0x2c] sm:$0xf]
    %v75 = vld [vmem:[%s3 + $0x30] sm:$0xf]
    %v76 = vld [vmem:[%s3 + $0x34] sm:$0xf]
    %v77 = vld [vmem:[%s3 + $0x38] sm:$0xf]
    %v78 = vld [vmem:[%s3 + $0x3c] sm:$0xf]
    %v79 = vld [vmem:[%s4] sm:$0x7]
    %v80 = vlaneseq
    %v81 = vshrl.u32 %v80, 7
    %v82 = vsub.s32 0, %v81
    %v83 = vrot.slane %v79, %v82
    %v100 = vunpack.c.l.b16 %v63
    %v101 = vunpack.c.l.b16 %v64
    %v102 = vunpack.c.l.b16 %v65
    %v103 = vunpack.c.l.b16 %v66
    %v104 = vunpack.c.l.b16 %v67
    %v105 = vunpack.c.l.b16 %v68
    %v106 = vunpack.c.l.b16 %v69
    %v107 = vunpack.c.l.b16 %v70
    %v108 = vunpack.c.l.b16 %v71
    %v109 = vunpack.c.l.b16 %v72
    %v110 = vunpack.c.l.b16 %v73
    %v111 = vunpack.c.l.b16 %v74
    %v112 = vunpack.c.l.b16 %v75
    %v113 = vunpack.c.l.b16 %v76
    %v114 = vunpack.c.l.b16 %v77
    %v115 = vunpack.c.l.b16 %v78
    %v116 = vpack.c.b16 %v101, %v100
    %v117 = vpack.c.b16 %v103, %v102
    %v118 = vpack.c.b16 %v105, %v104
    %v119 = vpack.c.b16 %v107, %v106
    %v120 = vpack.c.b16 %v109, %v108
    %v121 = vpack.c.b16 %v111, %v110
    %v122 = vpack.c.b16 %v113, %v112
    %v123 = vpack.c.b16 %v115, %v114
    %132 = vmatprep.subr.bf16.mxu0 0
    %133 = vmatpush1.bf16.msra.mxu0 %v116
    %134 = vmatprep.subr.bf16.mxu0 0
    %135 = vmatpush1.bf16.msra.mxu0 %v117
    %136 = vmatprep.subr.bf16.mxu0 0
    %137 = vmatpush1.bf16.msra.mxu0 %v118
    %138 = vmatprep.subr.bf16.mxu0 0
    %139 = vmatpush1.bf16.msra.mxu0 %v119
    %140 = vmatprep.subr.bf16.mxu0 0
    %141 = vmatpush1.bf16.msra.mxu0 %v120
    %142 = vmatprep.subr.bf16.mxu0 0
    %143 = vmatpush1.bf16.msra.mxu0 %v121
    %144 = vmatprep.subr.bf16.mxu0 0
    %145 = vmatpush1.bf16.msra.mxu0 %v122
    %146 = vmatprep.subr.bf16.mxu0 0
    %147 = vmatpush1.bf16.msra.mxu0 %v123
    %148 = vmatprep.subr.bf16.mxu0 0
    %149 = vmatpush1.bf16.msra.mxu0 0
    %150 = vmatprep.subr.bf16.mxu0 0
    %151 = vmatpush1.bf16.msra.mxu0 0
    %152 = vmatprep.subr.bf16.mxu0 0
    %153 = vmatpush1.bf16.msra.mxu0 0
    %154 = vmatprep.subr.bf16.mxu0 0
    %155 = vmatpush1.bf16.msra.mxu0 0
    %156 = vmatprep.subr.bf16.mxu0 0
    %157 = vmatpush1.bf16.msra.mxu0 0
    %158 = vmatprep.subr.bf16.mxu0 0
    %159 = vmatpush1.bf16.msra.mxu0 0
    %160 = vmatprep.subr.bf16.mxu0 0
    %161 = vmatpush1.bf16.msra.mxu0 0
    %162 = vmatprep.subr.bf16.mxu0 0
    %163 = vmatpush1.bf16.msra.mxu0 0
    %164 = vmatprep.mubr.bf16.mxu0 0
    %165 = vmatmul.mubr.bf16.gmra.mrb[0].mxu0 %v62
    %v166 = vpop.f32.mrb[0].mxu0
    %v167 = vadd.f32 %v83, %v166
    %v168 = vpop.f32.mrb[0].mxu0
    %v169 = vpop.f32.mrb[0].mxu0
    %v170 = vpop.f32.mrb[0].mxu0
    %171 = vdwg.mxu0
    %vm172 = vcmask 261120
    %v173 = vsel %vm172, %v167, 0.0
    %174 = vadd.xlane.f32.xlu0 %v173
    %v175 = vpop.xlane.xlu0 %174
    %v176 = vrcp.pop 32.0
    %v177 = vmul.f32 %v175, %v176
    %v178 = vsub.f32 %v167, %v177
    %v179 = vmul.f32 %v178, %v178
    %v180 = vsel %vm172, %v179, 0.0
    %181 = vadd.xlane.f32.xlu0 %v180
    %v182 = vpop.xlane.xlu0 %181
    %v183 = vmul.f32 %v182, %v176
    %v184 = vadd.f32 %v183, 1e-05
    %v185 = vrsqrt.pop %v184
    %v186 = vmul.f32 %v178, %v185
    %v187 = vlaneseq
    %v188 = vshrl.u32 %v187, 7
    %v189 = vsub.s32 1, %v188
    %v190 = vrot.slane %v79, %v189
    %v191 = vmul.f32 %v186, %v190
    %v192 = vlaneseq
    %v193 = vshrl.u32 %v192, 7
    %v194 = vsub.s32 2, %v193
    %v195 = vrot.slane %v79, %v194
    %v196 = vadd.f32 %v191, %v195
    %v197 = vpack.c.bf16 %v196, %v196
    %v198 = vld [vmem:[%s2] sm:$0xff]
    %v199 = vpack.c.bf16 %v198, %v198
    %v200 = vld [vmem:[%s9] sm:$0xf]
    %v201 = vld [vmem:[%s9 + $0x4] sm:$0xf]
    %v202 = vld [vmem:[%s9 + $0x8] sm:$0xf]
    %v203 = vld [vmem:[%s9 + $0xc] sm:$0xf]
    %v208 = vunpack.c.l.b16 %v200
    %v209 = vunpack.c.l.b16 %v201
    %v210 = vunpack.c.l.b16 %v202
    %v211 = vunpack.c.l.b16 %v203
    %v212 = vpack.c.b16 %v209, %v208
    %v213 = vpack.c.b16 %v211, %v210
    %v217 = vsel %vm172, %v199, 0
    %219 = vmatprep.subr.bf16.mxu0 0
    %220 = vmatpush1.bf16.msra.mxu0 %v212
    %221 = vmatprep.subr.bf16.mxu0 0
    %222 = vmatpush1.bf16.msra.mxu0 %v213
    %223 = vmatprep.subr.bf16.mxu0 0
    %224 = vmatpush1.bf16.msra.mxu0 0
    %225 = vmatprep.subr.bf16.mxu0 0
    %226 = vmatpush1.bf16.msra.mxu0 0
    %227 = vmatprep.subr.bf16.mxu0 0
    %228 = vmatpush1.bf16.msra.mxu0 0
    %229 = vmatprep.subr.bf16.mxu0 0
    %230 = vmatpush1.bf16.msra.mxu0 0
    %231 = vmatprep.subr.bf16.mxu0 0
    %232 = vmatpush1.bf16.msra.mxu0 0
    %233 = vmatprep.subr.bf16.mxu0 0
    %234 = vmatpush1.bf16.msra.mxu0 0
    %235 = vmatprep.subr.bf16.mxu0 0
    %236 = vmatpush1.bf16.msra.mxu0 0
    %237 = vmatprep.subr.bf16.mxu0 0
    %238 = vmatpush1.bf16.msra.mxu0 0
    %239 = vmatprep.subr.bf16.mxu0 0
    %240 = vmatpush1.bf16.msra.mxu0 0
    %241 = vmatprep.subr.bf16.mxu0 0
    %242 = vmatpush1.bf16.msra.mxu0 0
    %243 = vmatprep.subr.bf16.mxu0 0
    %244 = vmatpush1.bf16.msra.mxu0 0
    %245 = vmatprep.subr.bf16.mxu0 0
    %246 = vmatpush1.bf16.msra.mxu0 0
    %247 = vmatprep.subr.bf16.mxu0 0
    %248 = vmatpush1.bf16.msra.mxu0 0
    %249 = vmatprep.subr.bf16.mxu0 0
    %250 = vmatpush1.bf16.msra.mxu0 0
    %251 = vmatprep.mubr.bf16.mxu0 0
    %252 = vmatmul.mubr.bf16.gmra.mrb[0].mxu0 %v217
    %v253 = vpop.f32.mrb[0].mxu0
    %v254 = vadd.f32 0.0, %v253
    %v255 = vpop.f32.mrb[0].mxu0
    %v256 = vpop.f32.mrb[0].mxu0
    %v257 = vpop.f32.mrb[0].mxu0
    %258 = vdwg.mxu0
    %v259 = vld [vmem:[%s7] sm:$0xf]
    %v260 = vld [vmem:[%s7 + $0x4] sm:$0xf]
    %v261 = vld [vmem:[%s7 + $0x8] sm:$0xf]
    %v262 = vld [vmem:[%s7 + $0xc] sm:$0xf]
    %v263 = vld [vmem:[%s8] sm:$0x1]
    %v265 = vlaneseq
    %v266 = vshrl.u32 %v265, 7
    %v267 = vsub.s32 0, %v266
    %v268 = vrot.slane %v263, %v267
    %v274 = vunpack.c.l.b16 %v259
    %v275 = vunpack.c.l.b16 %v260
    %v276 = vunpack.c.l.b16 %v261
    %v277 = vunpack.c.l.b16 %v262
    %v278 = vpack.c.b16 %v275, %v274
    %v279 = vpack.c.b16 %v277, %v276
    %v283 = vsel %vm172, %v197, 0
    %285 = vmatprep.subr.bf16.mxu0 0
    %286 = vmatpush1.bf16.msra.mxu0 %v278
    %287 = vmatprep.subr.bf16.mxu0 0
    %288 = vmatpush1.bf16.msra.mxu0 %v279
    %289 = vmatprep.subr.bf16.mxu0 0
    %290 = vmatpush1.bf16.msra.mxu0 0
    %291 = vmatprep.subr.bf16.mxu0 0
    %292 = vmatpush1.bf16.msra.mxu0 0
    %293 = vmatprep.subr.bf16.mxu0 0
    %294 = vmatpush1.bf16.msra.mxu0 0
    %295 = vmatprep.subr.bf16.mxu0 0
    %296 = vmatpush1.bf16.msra.mxu0 0
    %297 = vmatprep.subr.bf16.mxu0 0
    %298 = vmatpush1.bf16.msra.mxu0 0
    %299 = vmatprep.subr.bf16.mxu0 0
    %300 = vmatpush1.bf16.msra.mxu0 0
    %301 = vmatprep.subr.bf16.mxu0 0
    %302 = vmatpush1.bf16.msra.mxu0 0
    %303 = vmatprep.subr.bf16.mxu0 0
    %304 = vmatpush1.bf16.msra.mxu0 0
    %305 = vmatprep.subr.bf16.mxu0 0
    %306 = vmatpush1.bf16.msra.mxu0 0
    %307 = vmatprep.subr.bf16.mxu0 0
    %308 = vmatpush1.bf16.msra.mxu0 0
    %309 = vmatprep.subr.bf16.mxu0 0
    %310 = vmatpush1.bf16.msra.mxu0 0
    %311 = vmatprep.subr.bf16.mxu0 0
    %312 = vmatpush1.bf16.msra.mxu0 0
    %313 = vmatprep.subr.bf16.mxu0 0
    %314 = vmatpush1.bf16.msra.mxu0 0
    %315 = vmatprep.subr.bf16.mxu0 0
    %316 = vmatpush1.bf16.msra.mxu0 0
    %317 = vmatprep.mubr.bf16.mxu0 0
    %318 = vmatmul.mubr.bf16.gmra.mrb[0].mxu0 %v283
    %v319 = vpop.f32.mrb[0].mxu0
    %v320 = vadd.f32 %v268, %v319
    %v321 = vpop.f32.mrb[0].mxu0
    %v322 = vpop.f32.mrb[0].mxu0
    %v323 = vpop.f32.mrb[0].mxu0
    %324 = vdwg.mxu0
    %v325 = vmul.f32 %v320, %v320
    %v326 = vmul.f32 %v320, %v325
    %v327 = vmul.f32 %v326, 0.044715
    %v328 = vadd.f32 %v320, %v327
    %v329 = vmul.f32 %v328, 0.7978846
    %v330 = vtanh.pop %v329
    %v331 = vadd.f32 %v330, 1.0
    %v332 = vmul.f32 %v331, 0.5
    %v333 = vmul.f32 %v320, %v332
    %v334 = vadd.f32 %v196, %v333
    %v335 = vpack.c.bf16 %v334, %v334
    %v336 = vpack.c.bf16 %v254, %v254
    %v338 = vsel %vm172, %v336, 0
    %v341 = vsel %vm172, %v335, 0
    %343 = vmatprep.subr.bf16.mxu0 0
    %344 = vmatpush1.bf16.xpose.msra.mxu0 %v341
    %345 = vmatprep.subr.bf16.mxu0 0
    %346 = vmatpush1.bf16.xpose.msra.mxu0 0
    %347 = vmatprep.subr.bf16.mxu0 0
    %348 = vmatpush1.bf16.xpose.msra.mxu0 0
    %349 = vmatprep.subr.bf16.mxu0 0
    %350 = vmatpush1.bf16.xpose.msra.mxu0 0
    %351 = vmatprep.subr.bf16.mxu0 0
    %352 = vmatpush1.bf16.xpose.msra.mxu0 0
    %353 = vmatprep.subr.bf16.mxu0 0
    %354 = vmatpush1.bf16.xpose.msra.mxu0 0
    %355 = vmatprep.subr.bf16.mxu0 0
    %356 = vmatpush1.bf16.xpose.msra.mxu0 0
    %357 = vmatprep.subr.bf16.mxu0 0
    %358 = vmatpush1.bf16.xpose.msra.mxu0 0
    %359 = vmatprep.subr.bf16.mxu0 0
    %360 = vmatpush1.bf16.xpose.msra.mxu0 0
    %361 = vmatprep.subr.bf16.mxu0 0
    %362 = vmatpush1.bf16.xpose.msra.mxu0 0
    %363 = vmatprep.subr.bf16.mxu0 0
    %364 = vmatpush1.bf16.xpose.msra.mxu0 0
    %365 = vmatprep.subr.bf16.mxu0 0
    %366 = vmatpush1.bf16.xpose.msra.mxu0 0
    %367 = vmatprep.subr.bf16.mxu0 0
    %368 = vmatpush1.bf16.xpose.msra.mxu0 0
    %369 = vmatprep.subr.bf16.mxu0 0
    %370 = vmatpush1.bf16.xpose.msra.mxu0 0
    %371 = vmatprep.subr.bf16.mxu0 0
    %372 = vmatpush1.bf16.xpose.msra.mxu0 0
    %373 = vmatprep.subr.bf16.mxu0 0
    %374 = vmatpush1.bf16.xpose.msra.mxu0 0
    %375 = vmatprep.mubr.bf16.mxu0 0
    %376 = vmatmul.mubr.bf16.gmra.mrb[0].mxu0 %v338
    %v377 = vpop.f32.mrb[0].mxu0
    %v378 = vadd.f32 0.0, %v377
    %v379 = vpop.f32.mrb[0].mxu0
    %v380 = vpop.f32.mrb[0].mxu0
    %v381 = vpop.f32.mrb[0].mxu0
    %382 = vdwg.mxu0
    %v383 = vld [vmem:[%s13] sm:$0xf]
    %vm384 = vcmask 64512
    %v386 = vsel %vm384, %v383, 0
    %vm388 = vcmask 1043456
    %v389 = vsel %vm388, %v335, 0
    %391 = vmatprep.subr.bf16.mxu0 0
    %392 = vmatpush1.bf16.msra.mxu0 %v389
    %393 = vmatprep.subr.bf16.mxu0 0
    %394 = vmatpush1.bf16.msra.mxu0 0
    %395 = vmatprep.subr.bf16.mxu0 0
    %396 = vmatpush1.bf16.msra.mxu0 0
    %397 = vmatprep.subr.bf16.mxu0 0
    %398 = vmatpush1.bf16.msra.mxu0 0
    %399 = vmatprep.subr.bf16.mxu0 0
    %400 = vmatpush1.bf16.msra.mxu0 0
    %401 = vmatprep.subr.bf16.mxu0 0
    %402 = vmatpush1.bf16.msra.mxu0 0
    %403 = vmatprep.subr.bf16.mxu0 0
    %404 = vmatpush1.bf16.msra.mxu0 0
    %405 = vmatprep.subr.bf16.mxu0 0
    %406 = vmatpush1.bf16.msra.mxu0 0
    %407 = vmatprep.subr.bf16.mxu0 0
    %408 = vmatpush1.bf16.msra.mxu0 0
    %409 = vmatprep.subr.bf16.mxu0 0
    %410 = vmatpush1.bf16.msra.mxu0 0
    %411 = vmatprep.subr.bf16.mxu0 0
    %412 = vmatpush1.bf16.msra.mxu0 0
    %413 = vmatprep.subr.bf16.mxu0 0
    %414 = vmatpush1.bf16.msra.mxu0 0
    %415 = vmatprep.subr.bf16.mxu0 0
    %416 = vmatpush1.bf16.msra.mxu0 0
    %417 = vmatprep.subr.bf16.mxu0 0
    %418 = vmatpush1.bf16.msra.mxu0 0
    %419 = vmatprep.subr.bf16.mxu0 0
    %420 = vmatpush1.bf16.msra.mxu0 0
    %421 = vmatprep.subr.bf16.mxu0 0
    %422 = vmatpush1.bf16.msra.mxu0 0
    %423 = vmatprep.mubr.bf16.mxu0 0
    %424 = vmatmul.mubr.bf16.gmra.mrb[0].mxu0 %v386
    %v425 = vpop.f32.mrb[0].mxu0
    %v426 = vadd.f32 0.0, %v425
    %v427 = vpop.f32.mrb[0].mxu0
    %v428 = vpop.f32.mrb[0].mxu0
    %v429 = vpop.f32.mrb[0].mxu0
    %430 = vdwg.mxu0
    %v432 = vrot.slane %v426, 4
    %433 = vrot.lane.b32.xlu0 %v432, 32
    %v434 = vpop.permute.xlu0 %433
    %v436 = vsel %vm172, %v426, %v434
    %v437 = vpack.c.bf16 %v436, %v436
    %v438 = vld [vmem:[%s5] sm:$0xf]
    %v439 = vld [vmem:[%s5 + $0x4] sm:$0xf]
    %v440 = vld [vmem:[%s5 + $0x8] sm:$0xf]
    %v441 = vld [vmem:[%s5 + $0xc] sm:$0xf]
    %v442 = vld [vmem:[%s5 + $0x10] sm:$0xf]
    %v443 = vld [vmem:[%s5 + $0x14] sm:$0xf]
    %v444 = vld [vmem:[%s5 + $0x18] sm:$0xf]
    %v445 = vld [vmem:[%s5 + $0x1c] sm:$0xf]
    %v446 = vld [vmem:[%s6] sm:$0x7]
    %v447 = vlaneseq
    %v448 = vshrl.u32 %v447, 7
    %v449 = vsub.s32 0, %v448
    %v450 = vrot.slane %v446, %v449
    %v459 = vunpack.c.l.b16 %v438
    %v460 = vunpack.c.l.b16 %v439
    %v461 = vunpack.c.l.b16 %v440
    %v462 = vunpack.c.l.b16 %v441
    %v463 = vunpack.c.l.b16 %v442
    %v464 = vunpack.c.l.b16 %v443
    %v465 = vunpack.c.l.b16 %v444
    %v466 = vunpack.c.l.b16 %v445
    %v467 = vpack.c.b16 %v460, %v459
    %v468 = vpack.c.b16 %v462, %v461
    %v469 = vpack.c.b16 %v464, %v463
    %v470 = vpack.c.b16 %v466, %v465
    %vm475 = vcmask 523264
    %v477 = vsel %vm475, %v437, 0
    %479 = vmatprep.subr.bf16.mxu0 0
    %480 = vmatpush1.bf16.msra.mxu0 %v467
    %481 = vmatprep.subr.bf16.mxu0 0
    %482 = vmatpush1.bf16.msra.mxu0 %v468
    %483 = vmatprep.subr.bf16.mxu0 0
    %484 = vmatpush1.bf16.msra.mxu0 %v469
    %485 = vmatprep.subr.bf16.mxu0 0
    %486 = vmatpush1.bf16.msra.mxu0 %v470
    %487 = vmatprep.subr.bf16.mxu0 0
    %488 = vmatpush1.bf16.msra.mxu0 0
    %489 = vmatprep.subr.bf16.mxu0 0
    %490 = vmatpush1.bf16.msra.mxu0 0
    %491 = vmatprep.subr.bf16.mxu0 0
    %492 = vmatpush1.bf16.msra.mxu0 0
    %493 = vmatprep.subr.bf16.mxu0 0
    %494 = vmatpush1.bf16.msra.mxu0 0
    %495 = vmatprep.subr.bf16.mxu0 0
    %496 = vmatpush1.bf16.msra.mxu0 0
    %497 = vmatprep.subr.bf16.mxu0 0
    %498 = vmatpush1.bf16.msra.mxu0 0
    %499 = vmatprep.subr.bf16.mxu0 0
    %500 = vmatpush1.bf16.msra.mxu0 0
    %501 = vmatprep.subr.bf16.mxu0 0
    %502 = vmatpush1.bf16.msra.mxu0 0
    %503 = vmatprep.subr.bf16.mxu0 0
    %504 = vmatpush1.bf16.msra.mxu0 0
    %505 = vmatprep.subr.bf16.mxu0 0
    %506 = vmatpush1.bf16.msra.mxu0 0
    %507 = vmatprep.subr.bf16.mxu0 0
    %508 = vmatpush1.bf16.msra.mxu0 0
    %509 = vmatprep.subr.bf16.mxu0 0
    %510 = vmatpush1.bf16.msra.mxu0 0
    %511 = vmatprep.mubr.bf16.mxu0 0
    %512 = vmatmul.mubr.bf16.gmra.mrb[0].mxu0 %v477
    %v513 = vpop.f32.mrb[0].mxu0
    %v514 = vadd.f32 %v450, %v513
    %v515 = vpop.f32.mrb[0].mxu0
    %v516 = vpop.f32.mrb[0].mxu0
    %v517 = vpop.f32.mrb[0].mxu0
    %518 = vdwg.mxu0
    %vm519 = vcmask 257024
    %v520 = vsel %vm519, %v514, 0.0
    %521 = vadd.xlane.f32.xlu0 %v520
    %v522 = vpop.xlane.xlu0 %521
    %v523 = vmul.f32 %v522, %v176
    %v524 = vsub.f32 %v514, %v523
    %v525 = vmul.f32 %v524, %v524
    %v526 = vsel %vm519, %v525, 0.0
    %527 = vadd.xlane.f32.xlu0 %v526
    %v528 = vpop.xlane.xlu0 %527
    %v529 = vmul.f32 %v528, %v176
    %v530 = vadd.f32 %v529, 1e-05
    %v531 = vrsqrt.pop %v530
    %v532 = vmul.f32 %v524, %v531
    %v533 = vlaneseq
    %v534 = vshrl.u32 %v533, 7
    %v535 = vsub.s32 1, %v534
    %v536 = vrot.slane %v446, %v535
    %v537 = vmul.f32 %v532, %v536
    %v538 = vlaneseq
    %v539 = vshrl.u32 %v538, 7
    %v540 = vsub.s32 2, %v539
    %v541 = vrot.slane %v446, %v540
    %v542 = vadd.f32 %v537, %v541
    %v543 = vpack.c.bf16 %v542, %v542
    %s544 = scalar_lea.vmem %s7, 16
    %v545 = vld [vmem:[%s544] sm:$0xf]
    %v546 = vld [vmem:[%s544 + $0x4] sm:$0xf]
    %v547 = vld [vmem:[%s544 + $0x8] sm:$0xf]
    %v548 = vld [vmem:[%s544 + $0xc] sm:$0xf]
    %s549 = scalar_lea.vmem %s8, 1
    %v550 = vld [vmem:[%s549] sm:$0x1]
    %v552 = vlaneseq
    %v553 = vshrl.u32 %v552, 7
    %v554 = vsub.s32 0, %v553
    %v555 = vrot.slane %v550, %v554
    %v561 = vunpack.c.l.b16 %v545
    %v562 = vunpack.c.l.b16 %v546
    %v563 = vunpack.c.l.b16 %v547
    %v564 = vunpack.c.l.b16 %v548
    %v565 = vpack.c.b16 %v562, %v561
    %v566 = vpack.c.b16 %v564, %v563
    %v570 = vsel %vm172, %v543, 0
    %572 = vmatprep.subr.bf16.mxu0 0
    %573 = vmatpush1.bf16.msra.mxu0 %v565
    %574 = vmatprep.subr.bf16.mxu0 0
    %575 = vmatpush1.bf16.msra.mxu0 %v566
    %576 = vmatprep.subr.bf16.mxu0 0
    %577 = vmatpush1.bf16.msra.mxu0 0
    %578 = vmatprep.subr.bf16.mxu0 0
    %579 = vmatpush1.bf16.msra.mxu0 0
    %580 = vmatprep.subr.bf16.mxu0 0
    %581 = vmatpush1.bf16.msra.mxu0 0
    %582 = vmatprep.subr.bf16.mxu0 0
    %583 = vmatpush1.bf16.msra.mxu0 0
    %584 = vmatprep.subr.bf16.mxu0 0
    %585 = vmatpush1.bf16.msra.mxu0 0
    %586 = vmatprep.subr.bf16.mxu0 0
    %587 = vmatpush1.bf16.msra.mxu0 0
    %588 = vmatprep.subr.bf16.mxu0 0
    %589 = vmatpush1.bf16.msra.mxu0 0
    %590 = vmatprep.subr.bf16.mxu0 0
    %591 = vmatpush1.bf16.msra.mxu0 0
    %592 = vmatprep.subr.bf16.mxu0 0
    %593 = vmatpush1.bf16.msra.mxu0 0
    %594 = vmatprep.subr.bf16.mxu0 0
    %595 = vmatpush1.bf16.msra.mxu0 0
    %596 = vmatprep.subr.bf16.mxu0 0
    %597 = vmatpush1.bf16.msra.mxu0 0
    %598 = vmatprep.subr.bf16.mxu0 0
    %599 = vmatpush1.bf16.msra.mxu0 0
    %600 = vmatprep.subr.bf16.mxu0 0
    %601 = vmatpush1.bf16.msra.mxu0 0
    %602 = vmatprep.subr.bf16.mxu0 0
    %603 = vmatpush1.bf16.msra.mxu0 0
    %604 = vmatprep.mubr.bf16.mxu0 0
    %605 = vmatmul.mubr.bf16.gmra.mrb[0].mxu0 %v570
    %v606 = vpop.f32.mrb[0].mxu0
    %v607 = vadd.f32 %v555, %v606
    %v608 = vpop.f32.mrb[0].mxu0
    %v609 = vpop.f32.mrb[0].mxu0
    %v610 = vpop.f32.mrb[0].mxu0
    %611 = vdwg.mxu0
    %v612 = vmul.f32 %v607, %v607
    %v613 = vmul.f32 %v607, %v612
    %v614 = vmul.f32 %v613, 0.044715
    %v615 = vadd.f32 %v607, %v614
    %v616 = vmul.f32 %v615, 0.7978846
    %v617 = vtanh.pop %v616
    %v618 = vadd.f32 %v617, 1.0
    %v619 = vmul.f32 %v618, 0.5
    %v620 = vmul.f32 %v607, %v619
    %v621 = vadd.f32 %v542, %v620
    %v622 = vpack.c.bf16 %v621, %v621
    %624 = vrot.lane.b32.xlu0 %v336, 96
    %v625 = vpop.permute.xlu0 %624
    %v627 = vsel %vm172, %v625, 0
    %v630 = vsel %vm172, %v622, 0
    %632 = vmatprep.subr.bf16.mxu0 0
    %633 = vmatpush1.bf16.xpose.msra.mxu0 %v630
    %634 = vmatprep.subr.bf16.mxu0 0
    %635 = vmatpush1.bf16.xpose.msra.mxu0 0
    %636 = vmatprep.subr.bf16.mxu0 0
    %637 = vmatpush1.bf16.xpose.msra.mxu0 0
    %638 = vmatprep.subr.bf16.mxu0 0
    %639 = vmatpush1.bf16.xpose.msra.mxu0 0
    %640 = vmatprep.subr.bf16.mxu0 0
    %641 = vmatpush1.bf16.xpose.msra.mxu0 0
    %642 = vmatprep.subr.bf16.mxu0 0
    %643 = vmatpush1.bf16.xpose.msra.mxu0 0
    %644 = vmatprep.subr.bf16.mxu0 0
    %645 = vmatpush1.bf16.xpose.msra.mxu0 0
    %646 = vmatprep.subr.bf16.mxu0 0
    %647 = vmatpush1.bf16.xpose.msra.mxu0 0
    %648 = vmatprep.subr.bf16.mxu0 0
    %649 = vmatpush1.bf16.xpose.msra.mxu0 0
    %650 = vmatprep.subr.bf16.mxu0 0
    %651 = vmatpush1.bf16.xpose.msra.mxu0 0
    %652 = vmatprep.subr.bf16.mxu0 0
    %653 = vmatpush1.bf16.xpose.msra.mxu0 0
    %654 = vmatprep.subr.bf16.mxu0 0
    %655 = vmatpush1.bf16.xpose.msra.mxu0 0
    %656 = vmatprep.subr.bf16.mxu0 0
    %657 = vmatpush1.bf16.xpose.msra.mxu0 0
    %658 = vmatprep.subr.bf16.mxu0 0
    %659 = vmatpush1.bf16.xpose.msra.mxu0 0
    %660 = vmatprep.subr.bf16.mxu0 0
    %661 = vmatpush1.bf16.xpose.msra.mxu0 0
    %662 = vmatprep.subr.bf16.mxu0 0
    %663 = vmatpush1.bf16.xpose.msra.mxu0 0
    %664 = vmatprep.mubr.bf16.mxu0 0
    %665 = vmatmul.mubr.bf16.gmra.mrb[0].mxu0 %v627
    %v666 = vpop.f32.mrb[0].mxu0
    %v667 = vadd.f32 0.0, %v666
    %v668 = vpop.f32.mrb[0].mxu0
    %v669 = vpop.f32.mrb[0].mxu0
    %v670 = vpop.f32.mrb[0].mxu0
    %671 = vdwg.mxu0
    %673 = vrot.lane.b32.xlu0 %v667, 8
    %v674 = vpop.permute.xlu0 %673
    %v676 = vsel %vm384, %v378, %v674
    %v677 = vlaneseq
    %v678 = vshrl.u32 %v677, 7
    %v679 = vsub.s32 0, %v678
    %v680 = vrot.slane %v198, %v679
    %v681 = vmul.f32 %v680, %v334
    %v682 = vmul.f32 %v680, %v621
    %v683 = vlaneseq
    %v684 = vshrl.u32 %v683, 7
    %v685 = vsub.s32 1, %v684
    %v686 = vrot.slane %v198, %v685
    %v687 = vmul.f32 %v686, %v334
    %v688 = vmul.f32 %v686, %v621
    %v689 = vlaneseq
    %v690 = vshrl.u32 %v689, 7
    %v691 = vsub.s32 2, %v690
    %v692 = vrot.slane %v198, %v691
    %v693 = vmul.f32 %v692, %v334
    %v694 = vmul.f32 %v692, %v621
    %v695 = vlaneseq
    %v696 = vshrl.u32 %v695, 7
    %v697 = vsub.s32 3, %v696
    %v698 = vrot.slane %v198, %v697
    %v699 = vmul.f32 %v698, %v334
    %v700 = vmul.f32 %v698, %v621
    %v701 = vlaneseq
    %v702 = vshrl.u32 %v701, 7
    %v703 = vsub.s32 4, %v702
    %v704 = vrot.slane %v198, %v703
    %v705 = vmul.f32 %v704, %v334
    %v706 = vmul.f32 %v704, %v621
    %v707 = vlaneseq
    %v708 = vshrl.u32 %v707, 7
    %v709 = vsub.s32 5, %v708
    %v710 = vrot.slane %v198, %v709
    %v711 = vmul.f32 %v710, %v334
    %v712 = vmul.f32 %v710, %v621
    %v713 = vlaneseq
    %v714 = vshrl.u32 %v713, 7
    %v715 = vsub.s32 6, %v714
    %v716 = vrot.slane %v198, %v715
    %v717 = vmul.f32 %v716, %v334
    %v718 = vmul.f32 %v716, %v621
    %v719 = vlaneseq
    %v720 = vshrl.u32 %v719, 7
    %v721 = vsub.s32 7, %v720
    %v722 = vrot.slane %v198, %v721
    %v723 = vmul.f32 %v722, %v334
    %v724 = vmul.f32 %v722, %v621
    %v727 = vrot.slane %v687, 4
    %v728 = vrot.slane %v688, 4
    %v729 = vsel %vm388, %v727, %v728
    %v734 = vrot.slane %v699, 4
    %v735 = vrot.slane %v700, 4
    %v736 = vsel %vm388, %v734, %v735
    %v741 = vrot.slane %v711, 4
    %v742 = vrot.slane %v712, 4
    %v743 = vsel %vm388, %v741, %v742
    %v748 = vrot.slane %v723, 4
    %v749 = vrot.slane %v724, 4
    %v750 = vsel %vm388, %v748, %v749
    %v753 = vsel %vm388, %v682, %v727
    %v754 = vsel %vm388, %v694, %v734
    %v755 = vsel %vm388, %v706, %v741
    %v756 = vsel %vm388, %v718, %v748
    %v757 = vpack.c.bf16 %v753, %v681
    %v758 = vpack.c.bf16 %v693, %v729
    %v759 = vpack.c.bf16 %v736, %v754
    %v760 = vpack.c.bf16 %v755, %v705
    %v761 = vpack.c.bf16 %v717, %v743
    %v762 = vpack.c.bf16 %v750, %v756
    %v763 = vld [vmem:[%s10] sm:$0xf]
    %v764 = vld [vmem:[%s10 + $0x4] sm:$0xf]
    %v765 = vld [vmem:[%s10 + $0x8] sm:$0xf]
    %v766 = vld [vmem:[%s10 + $0xc] sm:$0xf]
    %v767 = vld [vmem:[%s11] sm:$0x1]
    %v769 = vlaneseq
    %v770 = vshrl.u32 %v769, 7
    %v771 = vsub.s32 0, %v770
    %v772 = vrot.slane %v767, %v771
    %v778 = vunpack.c.l.b16 %v763
    %v779 = vunpack.c.l.b16 %v764
    %v780 = vunpack.c.l.b16 %v765
    %v781 = vunpack.c.l.b16 %v766
    %v782 = vpack.c.b16 %v779, %v778
    %v783 = vpack.c.b16 %v781, %v780
    %v787 = vsel %vm172, %v757, 0
    %v790 = vsel %vm172, %v758, 0
    %v793 = vsel %vm172, %v759, 0
    %v796 = vsel %vm172, %v760, 0
    %v799 = vsel %vm172, %v761, 0
    %v802 = vsel %vm172, %v762, 0
    %804 = vmatprep.subr.bf16.mxu0 0
    %805 = vmatpush1.bf16.msra.mxu0 %v782
    %806 = vmatprep.subr.bf16.mxu0 0
    %807 = vmatpush1.bf16.msra.mxu0 %v783
    %808 = vmatprep.subr.bf16.mxu0 0
    %809 = vmatpush1.bf16.msra.mxu0 0
    %810 = vmatprep.subr.bf16.mxu0 0
    %811 = vmatpush1.bf16.msra.mxu0 0
    %812 = vmatprep.subr.bf16.mxu0 0
    %813 = vmatpush1.bf16.msra.mxu0 0
    %814 = vmatprep.subr.bf16.mxu0 0
    %815 = vmatpush1.bf16.msra.mxu0 0
    %816 = vmatprep.subr.bf16.mxu0 0
    %817 = vmatpush1.bf16.msra.mxu0 0
    %818 = vmatprep.subr.bf16.mxu0 0
    %819 = vmatpush1.bf16.msra.mxu0 0
    %820 = vmatprep.subr.bf16.mxu0 0
    %821 = vmatpush1.bf16.msra.mxu0 0
    %822 = vmatprep.subr.bf16.mxu0 0
    %823 = vmatpush1.bf16.msra.mxu0 0
    %824 = vmatprep.subr.bf16.mxu0 0
    %825 = vmatpush1.bf16.msra.mxu0 0
    %826 = vmatprep.subr.bf16.mxu0 0
    %827 = vmatpush1.bf16.msra.mxu0 0
    %828 = vmatprep.subr.bf16.mxu0 0
    %829 = vmatpush1.bf16.msra.mxu0 0
    %830 = vmatprep.subr.bf16.mxu0 0
    %831 = vmatpush1.bf16.msra.mxu0 0
    %832 = vmatprep.subr.bf16.mxu0 0
    %833 = vmatpush1.bf16.msra.mxu0 0
    %834 = vmatprep.subr.bf16.mxu0 0
    %835 = vmatpush1.bf16.msra.mxu0 0
    %836 = vmatprep.mubr.bf16.mxu0 0
    %837 = vmatmul.mubr.bf16.gmra.mrb[0].mxu0 %v787
    %v838 = vpop.f32.mrb[0].mxu0
    %v839 = vadd.f32 %v772, %v838
    %v840 = vpop.f32.mrb[0].mxu0
    %v841 = vpop.f32.mrb[0].mxu0
    %v842 = vadd.f32 %v772, %v841
    %v843 = vpop.f32.mrb[0].mxu0
    %844 = vmatprep.mubr.bf16.mxu0 0
    %845 = vmatmul.mubr.bf16.gmra.mrb[0].mxu0 %v790
    %v846 = vpop.f32.mrb[0].mxu0
    %v847 = vadd.f32 %v772, %v846
    %v848 = vpop.f32.mrb[0].mxu0
    %v849 = vpop.f32.mrb[0].mxu0
    %v850 = vadd.f32 %v772, %v849
    %v851 = vpop.f32.mrb[0].mxu0
    %852 = vmatprep.mubr.bf16.mxu0 0
    %853 = vmatmul.mubr.bf16.gmra.mrb[0].mxu0 %v793
    %v854 = vpop.f32.mrb[0].mxu0
    %v855 = vadd.f32 %v772, %v854
    %v856 = vpop.f32.mrb[0].mxu0
    %v857 = vpop.f32.mrb[0].mxu0
    %v858 = vadd.f32 %v772, %v857
    %v859 = vpop.f32.mrb[0].mxu0
    %860 = vmatprep.mubr.bf16.mxu0 0
    %861 = vmatmul.mubr.bf16.gmra.mrb[0].mxu0 %v796
    %v862 = vpop.f32.mrb[0].mxu0
    %v863 = vadd.f32 %v772, %v862
    %v864 = vpop.f32.mrb[0].mxu0
    %v865 = vpop.f32.mrb[0].mxu0
    %v866 = vadd.f32 %v772, %v865
    %v867 = vpop.f32.mrb[0].mxu0
    %868 = vmatprep.mubr.bf16.mxu0 0
    %869 = vmatmul.mubr.bf16.gmra.mrb[0].mxu0 %v799
    %v870 = vpop.f32.mrb[0].mxu0
    %v871 = vadd.f32 %v772, %v870
    %v872 = vpop.f32.mrb[0].mxu0
    %v873 = vpop.f32.mrb[0].mxu0
    %v874 = vadd.f32 %v772, %v873
    %v875 = vpop.f32.mrb[0].mxu0
    %876 = vmatprep.mubr.bf16.mxu0 0
    %877 = vmatmul.mubr.bf16.gmra.mrb[0].mxu0 %v802
    %v878 = vpop.f32.mrb[0].mxu0
    %v879 = vadd.f32 %v772, %v878
    %v880 = vpop.f32.mrb[0].mxu0
    %v881 = vpop.f32.mrb[0].mxu0
    %v882 = vadd.f32 %v772, %v881
    %v883 = vpop.f32.mrb[0].mxu0
    %884 = vdwg.mxu0
    %v885 = vmax.f32 %v839, 0.0
    %v886 = vmax.f32 %v842, 0.0
    %v887 = vmax.f32 %v847, 0.0
    %v888 = vmax.f32 %v850, 0.0
    %v889 = vmax.f32 %v855, 0.0
    %v890 = vmax.f32 %v858, 0.0
    %v891 = vmax.f32 %v863, 0.0
    %v892 = vmax.f32 %v866, 0.0
    %v893 = vmax.f32 %v871, 0.0
    %v894 = vmax.f32 %v874, 0.0
    %v895 = vmax.f32 %v879, 0.0
    %v896 = vmax.f32 %v882, 0.0
    %v899 = vrot.slane %v886, 4
    %v900 = vrot.slane %v887, 4
    %v901 = vsel %vm388, %v899, %v900
    %v906 = vrot.slane %v889, 4
    %v907 = vrot.slane %v890, 4
    %v908 = vsel %vm388, %v906, %v907
    %v913 = vrot.slane %v892, 4
    %v914 = vrot.slane %v893, 4
    %v915 = vsel %vm388, %v913, %v914
    %v920 = vrot.slane %v895, 4
    %v921 = vrot.slane %v896, 4
    %v922 = vsel %vm388, %v920, %v921
    %v925 = vld [vmem:[%s12] sm:$0x3]
    %v926 = vlaneseq
    %v927 = vshrl.u32 %v926, 7
    %v928 = vsub.s32 0, %v927
    %v929 = vrot.slane %v925, %v928
    %v930 = vmul.f32 %v885, %v929
    %v931 = vmul.f32 %v886, %v929
    %v932 = vmul.f32 %v901, %v929
    %v933 = vmul.f32 %v900, %v929
    %v934 = vmul.f32 %v888, %v929
    %v935 = vmul.f32 %v889, %v929
    %v936 = vmul.f32 %v908, %v929
    %v937 = vmul.f32 %v907, %v929
    %v938 = vmul.f32 %v891, %v929
    %v939 = vmul.f32 %v892, %v929
    %v940 = vmul.f32 %v915, %v929
    %v941 = vmul.f32 %v914, %v929
    %v942 = vmul.f32 %v894, %v929
    %v943 = vmul.f32 %v895, %v929
    %v944 = vmul.f32 %v922, %v929
    %v945 = vmul.f32 %v921, %v929
    %v946 = vsel %vm172, %v930, 0.0
    %947 = vadd.xlane.f32.xlu0 %v946
    %v948 = vpop.xlane.xlu0 %947
    %v949 = vsel %vm519, %v931, 0.0
    %950 = vadd.xlane.f32.xlu0 %v949
    %v951 = vpop.xlane.xlu0 %950
    %v952 = vsel %vm172, %v932, 0.0
    %953 = vadd.xlane.f32.xlu0 %v952
    %v954 = vpop.xlane.xlu0 %953
    %v955 = vsel %vm519, %v933, 0.0
    %956 = vadd.xlane.f32.xlu0 %v955
    %v957 = vpop.xlane.xlu0 %956
    %v958 = vsel %vm172, %v934, 0.0
    %959 = vadd.xlane.f32.xlu0 %v958
    %v960 = vpop.xlane.xlu0 %959
    %v961 = vsel %vm519, %v935, 0.0
    %962 = vadd.xlane.f32.xlu0 %v961
    %v963 = vpop.xlane.xlu0 %962
    %v964 = vsel %vm172, %v936, 0.0
    %965 = vadd.xlane.f32.xlu0 %v964
    %v966 = vpop.xlane.xlu0 %965
    %v967 = vsel %vm519, %v937, 0.0
    %968 = vadd.xlane.f32.xlu0 %v967
    %v969 = vpop.xlane.xlu0 %968
    %v970 = vsel %vm172, %v938, 0.0
    %971 = vadd.xlane.f32.xlu0 %v970
    %v972 = vpop.xlane.xlu0 %971
    %v973 = vsel %vm519, %v939, 0.0
    %974 = vadd.xlane.f32.xlu0 %v973
    %v975 = vpop.xlane.xlu0 %974
    %v976 = vsel %vm172, %v940, 0.0
    %977 = vadd.xlane.f32.xlu0 %v976
    %v978 = vpop.xlane.xlu0 %977
    %v979 = vsel %vm519, %v941, 0.0
    %980 = vadd.xlane.f32.xlu0 %v979
    %v981 = vpop.xlane.xlu0 %980
    %v982 = vsel %vm172, %v942, 0.0
    %983 = vadd.xlane.f32.xlu0 %v982
    %v984 = vpop.xlane.xlu0 %983
    %v985 = vsel %vm519, %v943, 0.0
    %986 = vadd.xlane.f32.xlu0 %v985
    %v987 = vpop.xlane.xlu0 %986
    %v988 = vsel %vm172, %v944, 0.0
    %989 = vadd.xlane.f32.xlu0 %v988
    %v990 = vpop.xlane.xlu0 %989
    %v991 = vsel %vm519, %v945, 0.0
    %992 = vadd.xlane.f32.xlu0 %v991
    %v993 = vpop.xlane.xlu0 %992
    %s994 = sld [smem:[#allocation2]]
    %v995 = vstv %s994
    %v996 = vadd.f32 %v948, %v995
    %v997 = vadd.f32 %v951, %v995
    %v998 = vadd.f32 %v954, %v995
    %v999 = vadd.f32 %v957, %v995
    %v1000 = vadd.f32 %v960, %v995
    %v1001 = vadd.f32 %v963, %v995
    %v1002 = vadd.f32 %v966, %v995
    %v1003 = vadd.f32 %v969, %v995
    %v1004 = vadd.f32 %v972, %v995
    %v1005 = vadd.f32 %v975, %v995
    %v1006 = vadd.f32 %v978, %v995
    %v1007 = vadd.f32 %v981, %v995
    %v1008 = vadd.f32 %v984, %v995
    %v1009 = vadd.f32 %v987, %v995
    %v1010 = vadd.f32 %v990, %v995
    %v1011 = vadd.f32 %v993, %v995
    %v1012 = vlaneseq
    %v1013 = vshrl.u32 %v1012, 7
    %v1014 = vsub.s32 1, %v1013
    %v1015 = vrot.slane %v925, %v1014
    %v1016 = vmul.f32 %v885, %v1015
    %v1017 = vmul.f32 %v886, %v1015
    %v1018 = vmul.f32 %v901, %v1015
    %v1019 = vmul.f32 %v900, %v1015
    %v1020 = vmul.f32 %v888, %v1015
    %v1021 = vmul.f32 %v889, %v1015
    %v1022 = vmul.f32 %v908, %v1015
    %v1023 = vmul.f32 %v907, %v1015
    %v1024 = vmul.f32 %v891, %v1015
    %v1025 = vmul.f32 %v892, %v1015
    %v1026 = vmul.f32 %v915, %v1015
    %v1027 = vmul.f32 %v914, %v1015
    %v1028 = vmul.f32 %v894, %v1015
    %v1029 = vmul.f32 %v895, %v1015
    %v1030 = vmul.f32 %v922, %v1015
    %v1031 = vmul.f32 %v921, %v1015
    %v1032 = vsel %vm172, %v1016, 0.0
    %1033 = vadd.xlane.f32.xlu0 %v1032
    %v1034 = vpop.xlane.xlu0 %1033
    %v1035 = vsel %vm519, %v1017, 0.0
    %1036 = vadd.xlane.f32.xlu0 %v1035
    %v1037 = vpop.xlane.xlu0 %1036
    %v1038 = vsel %vm172, %v1018, 0.0
    %1039 = vadd.xlane.f32.xlu0 %v1038
    %v1040 = vpop.xlane.xlu0 %1039
    %v1041 = vsel %vm519, %v1019, 0.0
    %1042 = vadd.xlane.f32.xlu0 %v1041
    %v1043 = vpop.xlane.xlu0 %1042
    %v1044 = vsel %vm172, %v1020, 0.0
    %1045 = vadd.xlane.f32.xlu0 %v1044
    %v1046 = vpop.xlane.xlu0 %1045
    %v1047 = vsel %vm519, %v1021, 0.0
    %1048 = vadd.xlane.f32.xlu0 %v1047
    %v1049 = vpop.xlane.xlu0 %1048
    %v1050 = vsel %vm172, %v1022, 0.0
    %1051 = vadd.xlane.f32.xlu0 %v1050
    %v1052 = vpop.xlane.xlu0 %1051
    %v1053 = vsel %vm519, %v1023, 0.0
    %1054 = vadd.xlane.f32.xlu0 %v1053
    %v1055 = vpop.xlane.xlu0 %1054
    %v1056 = vsel %vm172, %v1024, 0.0
    %1057 = vadd.xlane.f32.xlu0 %v1056
    %v1058 = vpop.xlane.xlu0 %1057
    %v1059 = vsel %vm519, %v1025, 0.0
    %1060 = vadd.xlane.f32.xlu0 %v1059
    %v1061 = vpop.xlane.xlu0 %1060
    %v1062 = vsel %vm172, %v1026, 0.0
    %1063 = vadd.xlane.f32.xlu0 %v1062
    %v1064 = vpop.xlane.xlu0 %1063
    %v1065 = vsel %vm519, %v1027, 0.0
    %1066 = vadd.xlane.f32.xlu0 %v1065
    %v1067 = vpop.xlane.xlu0 %1066
    %v1068 = vsel %vm172, %v1028, 0.0
    %1069 = vadd.xlane.f32.xlu0 %v1068
    %v1070 = vpop.xlane.xlu0 %1069
    %v1071 = vsel %vm519, %v1029, 0.0
    %1072 = vadd.xlane.f32.xlu0 %v1071
    %v1073 = vpop.xlane.xlu0 %1072
    %v1074 = vsel %vm172, %v1030, 0.0
    %1075 = vadd.xlane.f32.xlu0 %v1074
    %v1076 = vpop.xlane.xlu0 %1075
    %v1077 = vsel %vm519, %v1031, 0.0
    %1078 = vadd.xlane.f32.xlu0 %v1077
    %v1079 = vpop.xlane.xlu0 %1078
    %s1080 = sld [smem:[#allocation2 + $0x1]]
    %v1081 = vstv %s1080
    %v1082 = vadd.f32 %v1034, %v1081
    %v1083 = vadd.f32 %v1037, %v1081
    %v1084 = vadd.f32 %v1040, %v1081
    %v1085 = vadd.f32 %v1043, %v1081
    %v1086 = vadd.f32 %v1046, %v1081
    %v1087 = vadd.f32 %v1049, %v1081
    %v1088 = vadd.f32 %v1052, %v1081
    %v1089 = vadd.f32 %v1055, %v1081
    %v1090 = vadd.f32 %v1058, %v1081
    %v1091 = vadd.f32 %v1061, %v1081
    %v1092 = vadd.f32 %v1064, %v1081
    %v1093 = vadd.f32 %v1067, %v1081
    %v1094 = vadd.f32 %v1070, %v1081
    %v1095 = vadd.f32 %v1073, %v1081
    %v1096 = vadd.f32 %v1076, %v1081
    %v1097 = vadd.f32 %v1079, %v1081
    %v1098 = vxor.u32 %v676, 2147483648
    %v1099 = vmul.f32 %v1098, 1.442695
    %v1100 = vpow.pop %v1099
    %v1101 = vadd.f32 %v1100, 1.0
    %v1102 = vrcp.pop %v1101
    %v1103 = vmul.f32 1.0, %v1102
    %v1120 = vlaneseq
    %v1121 = vand.u32 %v1120, 127
    %v1122 = vlaneseq
    %v1123 = vshrl.u32 %v1122, 7
    %v1124 = vsub.s32 %v1121, %v1123
    %v1125 = vrot.slane %v996, %v1124
    %v1126 = vadd.s32 %v1121, 4294967288
    %v1127 = vlaneseq
    %v1128 = vshrl.u32 %v1127, 7
    %v1129 = vsub.s32 %v1126, %v1128
    %v1130 = vrot.slane %v997, %v1129
    %vm1131 = vcmask 130112
    %v1132 = vsel %vm1131, %v1130, %v1125
    %v1133 = vlaneseq
    %v1134 = vshrl.u32 %v1133, 7
    %v1135 = vsub.s32 %v1121, %v1134
    %v1136 = vrot.slane %v998, %v1135
    %v1137 = vlaneseq
    %v1138 = vshrl.u32 %v1137, 7
    %v1139 = vsub.s32 %v1126, %v1138
    %v1140 = vrot.slane %v999, %v1139
    %v1141 = vsel %vm1131, %v1140, %v1136
    %v1142 = vlaneseq
    %v1143 = vshrl.u32 %v1142, 7
    %v1144 = vsub.s32 %v1121, %v1143
    %v1145 = vrot.slane %v1000, %v1144
    %v1146 = vlaneseq
    %v1147 = vshrl.u32 %v1146, 7
    %v1148 = vsub.s32 %v1126, %v1147
    %v1149 = vrot.slane %v1001, %v1148
    %v1150 = vsel %vm1131, %v1149, %v1145
    %v1151 = vlaneseq
    %v1152 = vshrl.u32 %v1151, 7
    %v1153 = vsub.s32 %v1121, %v1152
    %v1154 = vrot.slane %v1002, %v1153
    %v1155 = vlaneseq
    %v1156 = vshrl.u32 %v1155, 7
    %v1157 = vsub.s32 %v1126, %v1156
    %v1158 = vrot.slane %v1003, %v1157
    %v1159 = vsel %vm1131, %v1158, %v1154
    %v1160 = vlaneseq
    %v1161 = vshrl.u32 %v1160, 7
    %v1162 = vsub.s32 %v1121, %v1161
    %v1163 = vrot.slane %v1004, %v1162
    %v1164 = vlaneseq
    %v1165 = vshrl.u32 %v1164, 7
    %v1166 = vsub.s32 %v1126, %v1165
    %v1167 = vrot.slane %v1005, %v1166
    %v1168 = vsel %vm1131, %v1167, %v1163
    %v1169 = vlaneseq
    %v1170 = vshrl.u32 %v1169, 7
    %v1171 = vsub.s32 %v1121, %v1170
    %v1172 = vrot.slane %v1006, %v1171
    %v1173 = vlaneseq
    %v1174 = vshrl.u32 %v1173, 7
    %v1175 = vsub.s32 %v1126, %v1174
    %v1176 = vrot.slane %v1007, %v1175
    %v1177 = vsel %vm1131, %v1176, %v1172
    %v1178 = vlaneseq
    %v1179 = vshrl.u32 %v1178, 7
    %v1180 = vsub.s32 %v1121, %v1179
    %v1181 = vrot.slane %v1008, %v1180
    %v1182 = vlaneseq
    %v1183 = vshrl.u32 %v1182, 7
    %v1184 = vsub.s32 %v1126, %v1183
    %v1185 = vrot.slane %v1009, %v1184
    %v1186 = vsel %vm1131, %v1185, %v1181
    %v1187 = vlaneseq
    %v1188 = vshrl.u32 %v1187, 7
    %v1189 = vsub.s32 %v1121, %v1188
    %v1190 = vrot.slane %v1010, %v1189
    %v1191 = vlaneseq
    %v1192 = vshrl.u32 %v1191, 7
    %v1193 = vsub.s32 %v1126, %v1192
    %v1194 = vrot.slane %v1011, %v1193
    %v1195 = vsel %vm1131, %v1194, %v1190
    %vm1196 = vcmask 1041409
    %v1197 = vsel %vm1196, %v1141, %v1132
    %vm1198 = vcmask 1042434
    %v1199 = vsel %vm1198, %v1150, %v1197
    %vm1200 = vcmask 1043459
    %v1201 = vsel %vm1200, %v1159, %v1199
    %vm1202 = vcmask 1044484
    %v1203 = vsel %vm1202, %v1168, %v1201
    %vm1204 = vcmask 1045509
    %v1205 = vsel %vm1204, %v1177, %v1203
    %vm1206 = vcmask 1046534
    %v1207 = vsel %vm1206, %v1186, %v1205
    %vm1208 = vcmask 1047559
    %v1209 = vsel %vm1208, %v1195, %v1207
    %v1227 = vlaneseq
    %v1228 = vshrl.u32 %v1227, 7
    %v1229 = vsub.s32 %v1121, %v1228
    %v1230 = vrot.slane %v1082, %v1229
    %v1231 = vlaneseq
    %v1232 = vshrl.u32 %v1231, 7
    %v1233 = vsub.s32 %v1126, %v1232
    %v1234 = vrot.slane %v1083, %v1233
    %v1235 = vsel %vm1131, %v1234, %v1230
    %v1236 = vlaneseq
    %v1237 = vshrl.u32 %v1236, 7
    %v1238 = vsub.s32 %v1121, %v1237
    %v1239 = vrot.slane %v1084, %v1238
    %v1240 = vlaneseq
    %v1241 = vshrl.u32 %v1240, 7
    %v1242 = vsub.s32 %v1126, %v1241
    %v1243 = vrot.slane %v1085, %v1242
    %v1244 = vsel %vm1131, %v1243, %v1239
    %v1245 = vlaneseq
    %v1246 = vshrl.u32 %v1245, 7
    %v1247 = vsub.s32 %v1121, %v1246
    %v1248 = vrot.slane %v1086, %v1247
    %v1249 = vlaneseq
    %v1250 = vshrl.u32 %v1249, 7
    %v1251 = vsub.s32 %v1126, %v1250
    %v1252 = vrot.slane %v1087, %v1251
    %v1253 = vsel %vm1131, %v1252, %v1248
    %v1254 = vlaneseq
    %v1255 = vshrl.u32 %v1254, 7
    %v1256 = vsub.s32 %v1121, %v1255
    %v1257 = vrot.slane %v1088, %v1256
    %v1258 = vlaneseq
    %v1259 = vshrl.u32 %v1258, 7
    %v1260 = vsub.s32 %v1126, %v1259
    %v1261 = vrot.slane %v1089, %v1260
    %v1262 = vsel %vm1131, %v1261, %v1257
    %v1263 = vlaneseq
    %v1264 = vshrl.u32 %v1263, 7
    %v1265 = vsub.s32 %v1121, %v1264
    %v1266 = vrot.slane %v1090, %v1265
    %v1267 = vlaneseq
    %v1268 = vshrl.u32 %v1267, 7
    %v1269 = vsub.s32 %v1126, %v1268
    %v1270 = vrot.slane %v1091, %v1269
    %v1271 = vsel %vm1131, %v1270, %v1266
    %v1272 = vlaneseq
    %v1273 = vshrl.u32 %v1272, 7
    %v1274 = vsub.s32 %v1121, %v1273
    %v1275 = vrot.slane %v1092, %v1274
    %v1276 = vlaneseq
    %v1277 = vshrl.u32 %v1276, 7
    %v1278 = vsub.s32 %v1126, %v1277
    %v1279 = vrot.slane %v1093, %v1278
    %v1280 = vsel %vm1131, %v1279, %v1275
    %v1281 = vlaneseq
    %v1282 = vshrl.u32 %v1281, 7
    %v1283 = vsub.s32 %v1121, %v1282
    %v1284 = vrot.slane %v1094, %v1283
    %v1285 = vlaneseq
    %v1286 = vshrl.u32 %v1285, 7
    %v1287 = vsub.s32 %v1126, %v1286
    %v1288 = vrot.slane %v1095, %v1287
    %v1289 = vsel %vm1131, %v1288, %v1284
    %v1290 = vlaneseq
    %v1291 = vshrl.u32 %v1290, 7
    %v1292 = vsub.s32 %v1121, %v1291
    %v1293 = vrot.slane %v1096, %v1292
    %v1294 = vlaneseq
    %v1295 = vshrl.u32 %v1294, 7
    %v1296 = vsub.s32 %v1126, %v1295
    %v1297 = vrot.slane %v1097, %v1296
    %v1298 = vsel %vm1131, %v1297, %v1293
    %v1299 = vsel %vm1196, %v1244, %v1235
    %v1300 = vsel %vm1198, %v1253, %v1299
    %v1301 = vsel %vm1200, %v1262, %v1300
    %v1302 = vsel %vm1202, %v1271, %v1301
    %v1303 = vsel %vm1204, %v1280, %v1302
    %v1304 = vsel %vm1206, %v1289, %v1303
    %v1305 = vsel %vm1208, %v1298, %v1304
    %vm1307 = vcmask 97280
    %v1308 = vsel %vm1307, %v1103, 0.0
    %v1309 = vsel %vm1307, %v1209, 0.0
    %v1310 = vsel %vm1307, %v1305, 0.0
    %1311 = vst [vmem:[%s14] sm:$0xff] %v1308
    %1312 = vst [vmem:[%s14 + $0x8] sm:$0xff] %v1309
    %1313 = vst [vmem:[%s14 + $0x10] sm:$0xff] %v1310
    // Predicated region
    $region62: #{soonet_forward_test.1} parent=1 // pred_check
      _
    $region63: #{soonet_forward_test.1} parent=1 // pred_check_branch
      %1315 = sbr.rel (0) target = $region65
    $region64: #{soonet_forward_test.1} parent=1 // pred_region
      _
    $region65: #{soonet_forward_test.1} parent=1 // pred_fallthru
      _
    // Predicated region
    $region66: #{soonet_forward_test.1} parent=1 // pred_check
      _
    $region67: #{soonet_forward_test.1} parent=1 // pred_check_branch
      %1317 = sbr.rel (0) target = $region69
    $region68: #{soonet_forward_test.1} parent=1 // pred_region
      _
    $region69: #{soonet_forward_test.1} parent=1 // pred_fallthru
      _
    %1318 = vsyncpa [#allocation3], 1

</llo_original>
